<compile_context>
chip_gen: v7x
topology: tpu7x:2x2x1
jax: 0.10.0
libtpu: 0.0.40
codegen_flags: <defaults>
</compile_context>

<pallas_src>
import functools

import jax
import jax.numpy as jnp
from jax.experimental import pallas as pl
from jax.experimental.pallas import tpu as pltpu


def _convlstm_kernel(x_ref, w_ref, b_ref, c_ref, newh_ref, newc_ref, *, Cout):
    """One M-tile of the fused conv + LSTM gate math.

    x_ref    : [K, tile_M]      im2col patches (K = KH*KW*Cin), lane-dense M
    w_ref    : [4*Cout, K]      repacked conv weight
    b_ref    : [4*Cout, 1]      bias with forget_bias pre-folded into the f rows
    c_ref    : [Cout, tile_M]   previous cell state (flattened NCHW)
    newh_ref : [Cout, tile_M]
    newc_ref : [Cout, tile_M]
    """
    # Single MXU matmul; result is [4*Cout, tile_M] so gates split on sublanes.
    acc = jnp.dot(w_ref[...], x_ref[...], preferred_element_type=jnp.float32)
    acc = acc + b_ref[...].astype(jnp.float32)        # [4*Cout,1] broadcast over lanes

    # Gate split along the sublane axis at 8-aligned offsets (i, j, f, o).
    i = acc[0 * Cout:1 * Cout, :]
    j = acc[1 * Cout:2 * Cout, :]
    f = acc[2 * Cout:3 * Cout, :]    # forget_bias already folded into the bias
    o = acc[3 * Cout:4 * Cout, :]

    c = c_ref[...].astype(jnp.float32)
    new_c = c * jax.nn.sigmoid(f) + jax.nn.sigmoid(i) * jnp.tanh(j)
    new_h = jnp.tanh(new_c) * jax.nn.sigmoid(o)

    newc_ref[...] = new_c.astype(newc_ref.dtype)
    newh_ref[...] = new_h.astype(newh_ref.dtype)


def _pick_tile_m(M):
    # Lane-dense tiles (multiple of 128).  Prefer >=2 grid steps so both v7x
    # TensorCores get work, but keep the step count tiny (~0.35us overhead/step).
    for t in (512, 256, 128):
        if M % t == 0 and M // t >= 2:
            return t
    return M


def conv_lstm_forward(inputs_nchw, states, weight_oihw, bias, *,
                      out_channels, kernel_size=5, forget_bias=1.0, padding=0,
                      matmul_dtype=None):
    """Mirrors ConvLSTM.forward.  inputs_nchw: [B, Cin, H, W] (NCHW like PyTorch)."""
    B, Cin_x, H, W = inputs_nchw.shape
    if states is None:
        z = jnp.zeros((B, out_channels, H, W), inputs_nchw.dtype)
        states = (z, z)
    if not isinstance(states, tuple):
        raise TypeError("states type is not right")
    c_nchw, h_nchw = states
    if not (c_nchw.ndim == 4 and h_nchw.ndim == 4 and inputs_nchw.ndim == 4):
        raise TypeError("")

    KH = KW = kernel_size
    pad = padding
    Ho = H + 2 * pad - KH + 1
    Wo = W + 2 * pad - KW + 1
    # Same constraint as PyTorch (it would fail broadcasting otherwise).
    assert Ho == H and Wo == W, "state update requires conv to preserve spatial dims"
    Cin = Cin_x + out_channels
    Cout = out_channels
    K = KH * KW * Cin
    M = B * H * W

    # ---- glue in plain JAX: layout, concat, pad, im2col, weight repack ----
    x = jnp.transpose(inputs_nchw, (0, 2, 3, 1))                   # NHWC
    h = jnp.transpose(h_nchw, (0, 2, 3, 1))
    xh = jnp.concatenate([x, h], axis=-1)                          # [B, H, W, Cin]
    xh_p = jnp.pad(xh, ((0, 0), (pad, pad), (pad, pad), (0, 0)))   # [B, Hp, Wp, Cin]

    # im2col: [B, H, W, KH*KW, Cin] -> [M, K] -> [K, M]  (tap order = (kh, kw, cin))
    taps = [xh_p[:, kh:kh + H, kw:kw + W, :]
            for kh in range(KH) for kw in range(KW)]
    patches = jnp.stack(taps, axis=3).reshape(M, K)
    x_t = patches.T                                                # [K, M]

    # PyTorch OIHW -> [4*Cout, KH*KW*Cin] matching the (kh, kw, cin) patch order.
    w_t = jnp.transpose(weight_oihw, (0, 2, 3, 1)).reshape(4 * Cout, K)
    # Fold forget_bias into the f-gate bias rows; bias as a sublane column.
    b_adj = bias.at[2 * Cout:3 * Cout].add(forget_bias).reshape(4 * Cout, 1)
    # Cell state in transposed flattened-NCHW layout: [Cout, B*H*W].
    c_t = jnp.transpose(c_nchw, (1, 0, 2, 3)).reshape(Cout, M)

    if matmul_dtype is not None:
        # bf16 operands roughly double MXU throughput on v6e/v7x (keep f32 accum).
        x_t = x_t.astype(matmul_dtype)
        w_t = w_t.astype(matmul_dtype)

    tile_m = _pick_tile_m(M)
    grid = (M // tile_m,)

    kernel = functools.partial(_convlstm_kernel, Cout=Cout)

    new_h_t, new_c_t = pl.pallas_call(
        kernel,
        out_shape=(
            jax.ShapeDtypeStruct((Cout, M), inputs_nchw.dtype),
            jax.ShapeDtypeStruct((Cout, M), inputs_nchw.dtype),
        ),
        grid_spec=pltpu.PrefetchScalarGridSpec(
            num_scalar_prefetch=0,
            grid=grid,
            in_specs=[
                pl.BlockSpec((K, tile_m), lambda m: (0, m)),
                pl.BlockSpec((4 * Cout, K), lambda m: (0, 0)),
                pl.BlockSpec((4 * Cout, 1), lambda m: (0, 0)),
                pl.BlockSpec((Cout, tile_m), lambda m: (0, m)),
            ],
            out_specs=(
                pl.BlockSpec((Cout, tile_m), lambda m: (0, m)),
                pl.BlockSpec((Cout, tile_m), lambda m: (0, m)),
            ),
        ),
        compiler_params=pltpu.CompilerParams(dimension_semantics=("parallel",)),
    )(x_t, w_t, b_adj, c_t)

    # [Cout, B*H*W] -> NCHW
    new_h = jnp.transpose(new_h_t.reshape(Cout, B, H, W), (1, 0, 2, 3))
    new_c = jnp.transpose(new_c_t.reshape(Cout, B, H, W), (1, 0, 2, 3))
    return new_h, (new_c, new_h)


def _reference(x, c0, h0, weight, bias, padding, forget_bias, out_channels):
    """Pure-JAX (XLA) reference identical to the PyTorch forward, NCHW."""
    xh = jnp.concatenate([x, h0], axis=1)
    out = jax.lax.conv_general_dilated(
        xh, weight, window_strides=(1, 1),
        padding=((padding, padding), (padding, padding)),
        dimension_numbers=("NCHW", "OIHW", "NCHW"),
        precision=jax.lax.Precision.HIGHEST)
    out = out + bias[None, :, None, None]
    i, j, f, o = jnp.split(out, 4, axis=1)
    new_c = c0 * jax.nn.sigmoid(f + forget_bias) + jax.nn.sigmoid(i) * jnp.tanh(j)
    new_h = jnp.tanh(new_c) * jax.nn.sigmoid(o)
    return new_h, new_c


if __name__ == "__main__":
    B, Cin_x, H, W = 2, 4, 16, 16
    Cout = 32
    Kk = 5
    pad = 2            # = kernel_size // 2 so the recurrent state math is well defined
    forget_bias = 1.0

    key = jax.random.PRNGKey(0)
    k1, k2, k3, k4, k5 = jax.random.split(key, 5)
    x = jax.random.normal(k1, (B, Cin_x, H, W), jnp.float32)
    c0 = jax.random.normal(k2, (B, Cout, H, W), jnp.float32)
    h0 = jax.random.normal(k3, (B, Cout, H, W), jnp.float32)

    # Deterministic Conv2d(out_channels + in_channels -> 4*out_channels, k=5) params.
    fan_in = (Cin_x + Cout) * Kk * Kk
    wscale = 1.0 / (fan_in ** 0.5)
    weight = jax.random.uniform(k4, (4 * Cout, Cin_x + Cout, Kk, Kk),
                                jnp.float32, -wscale, wscale)
    bias = jax.random.uniform(k5, (4 * Cout,), jnp.float32, -wscale, wscale)

    new_h, (new_c, new_h2) = conv_lstm_forward(
        x, (c0, h0), weight, bias,
        out_channels=Cout, kernel_size=Kk, forget_bias=forget_bias, padding=pad)
    jax.block_until_ready((new_h, new_c))

    ref_h, ref_c = _reference(x, c0, h0, weight, bias, pad, forget_bias, Cout)
    # K≈900 f32 contraction on the MXU vs. HIGHEST-precision XLA conv reference;
    # allow a small accumulation-order margin.
    assert jnp.allclose(new_h, ref_h, atol=2e-3, rtol=2e-3), "new_h mismatch"
    assert jnp.allclose(new_c, ref_c, atol=2e-3, rtol=2e-3), "new_c mismatch"

    print("KERNEL_OK")
</pallas_src>

<mosaic_0001>
module attributes {stable_mosaic.version = 11 : i64} {
  func.func @_convlstm_kernel(%arg0: i32, %arg1: memref<900x256xf32, #tpu.memory_space<vmem>>, %arg2: memref<128x900xf32, #tpu.memory_space<vmem>>, %arg3: memref<128x1xf32, #tpu.memory_space<vmem>>, %arg4: memref<32x256xf32, #tpu.memory_space<vmem>>, %arg5: memref<32x256xf32, #tpu.memory_space<vmem>>, %arg6: memref<32x256xf32, #tpu.memory_space<vmem>>) attributes {dimension_semantics = [#tpu.dimension_semantics<parallel>], iteration_bounds = array<i64: 2>, scalar_prefetch = 0 : i64, scratch_operands = 0 : i64, tpu.core_type = #tpu.core_type<tc>, window_params = [{transform_indices = @transform_0, window_bounds = array<i64: 900, 256>}, {pipeline_mode = #tpu.pipeline_mode<synchronous>, transform_indices = @transform_1, window_bounds = array<i64: 128, 900>}, {pipeline_mode = #tpu.pipeline_mode<synchronous>, transform_indices = @transform_2, window_bounds = array<i64: 128, 1>}, {transform_indices = @transform_3, window_bounds = array<i64: 32, 256>}, {transform_indices = @transform_4, window_bounds = array<i64: 32, 256>}, {transform_indices = @transform_5, window_bounds = array<i64: 32, 256>}]} {
    %c0 = arith.constant 0 : index
    %c0_0 = arith.constant 0 : index
    %0 = vector.load %arg2[%c0, %c0_0] : memref<128x900xf32, #tpu.memory_space<vmem>>, vector<128x900xf32>
    %c0_1 = arith.constant 0 : index
    %c0_2 = arith.constant 0 : index
    %1 = vector.load %arg1[%c0_1, %c0_2] : memref<900x256xf32, #tpu.memory_space<vmem>>, vector<900x256xf32>
    %cst = arith.constant dense<0.000000e+00> : vector<128x256xf32>
    %2 = tpu.matmul %0, %1, %cst {dimension_numbers = #tpu.dot_dimension_numbers<[1], [0], [0], [1], [0, 0, 1, 1], [], []>} : vector<128x900xf32>, vector<900x256xf32>, vector<128x256xf32> -> vector<128x256xf32>
    %c0_3 = arith.constant 0 : index
    %c0_4 = arith.constant 0 : index
    %3 = vector.load %arg3[%c0_3, %c0_4] : memref<128x1xf32, #tpu.memory_space<vmem>>, vector<128x1xf32>
    %4 = vector.broadcast %3 : vector<128x1xf32> to vector<128x256xf32>
    %5 = arith.addf %2, %4 : vector<128x256xf32>
    %6 = vector.extract_strided_slice %5 {offsets = [0, 0], sizes = [32, 256], strides = [1, 1]} : vector<128x256xf32> to vector<32x256xf32>
    %7 = vector.extract_strided_slice %5 {offsets = [32, 0], sizes = [32, 256], strides = [1, 1]} : vector<128x256xf32> to vector<32x256xf32>
    %8 = vector.extract_strided_slice %5 {offsets = [64, 0], sizes = [32, 256], strides = [1, 1]} : vector<128x256xf32> to vector<32x256xf32>
    %9 = vector.extract_strided_slice %5 {offsets = [96, 0], sizes = [32, 256], strides = [1, 1]} : vector<128x256xf32> to vector<32x256xf32>
    %c0_5 = arith.constant 0 : index
    %c0_6 = arith.constant 0 : index
    %10 = vector.load %arg4[%c0_5, %c0_6] : memref<32x256xf32, #tpu.memory_space<vmem>>, vector<32x256xf32>
    %11 = arith.negf %8 : vector<32x256xf32>
    %12 = math.exp %11 : vector<32x256xf32>
    %cst_7 = arith.constant 1.000000e+00 : f32
    %13 = vector.broadcast %cst_7 : f32 to vector<32x256xf32>
    %14 = arith.addf %13, %12 : vector<32x256xf32>
    %15 = arith.divf %13, %14 : vector<32x256xf32>
    %16 = arith.mulf %10, %15 : vector<32x256xf32>
    %17 = arith.negf %6 : vector<32x256xf32>
    %18 = math.exp %17 : vector<32x256xf32>
    %cst_8 = arith.constant 1.000000e+00 : f32
    %19 = vector.broadcast %cst_8 : f32 to vector<32x256xf32>
    %20 = arith.addf %19, %18 : vector<32x256xf32>
    %21 = arith.divf %19, %20 : vector<32x256xf32>
    %22 = math.tanh %7 : vector<32x256xf32>
    %23 = arith.mulf %21, %22 : vector<32x256xf32>
    %24 = arith.addf %16, %23 : vector<32x256xf32>
    %25 = math.tanh %24 : vector<32x256xf32>
    %26 = arith.negf %9 : vector<32x256xf32>
    %27 = math.exp %26 : vector<32x256xf32>
    %cst_9 = arith.constant 1.000000e+00 : f32
    %28 = vector.broadcast %cst_9 : f32 to vector<32x256xf32>
    %29 = arith.addf %28, %27 : vector<32x256xf32>
    %30 = arith.divf %28, %29 : vector<32x256xf32>
    %31 = arith.mulf %25, %30 : vector<32x256xf32>
    %c0_10 = arith.constant 0 : index
    %c0_11 = arith.constant 0 : index
    %32 = vector.load %arg6[%c0_10, %c0_11] : memref<32x256xf32, #tpu.memory_space<vmem>>, vector<32x256xf32>
    tpu.vector_store %arg6[%c0_10, %c0_11], %24 {strides = array<i32>} : memref<32x256xf32, #tpu.memory_space<vmem>>, vector<32x256xf32>,
    %c0_12 = arith.constant 0 : index
    %c0_13 = arith.constant 0 : index
    %33 = vector.load %arg5[%c0_12, %c0_13] : memref<32x256xf32, #tpu.memory_space<vmem>>, vector<32x256xf32>
    tpu.vector_store %arg5[%c0_12, %c0_13], %31 {strides = array<i32>} : memref<32x256xf32, #tpu.memory_space<vmem>>, vector<32x256xf32>,
    return
  }
  func.func @transform_0(%arg0: i32) -> (i32, i32) {
    %c0_i32 = arith.constant 0 : i32
    %c0_i32_0 = arith.constant 0 : i32
    return %c0_i32, %arg0 : i32, i32
  }
  func.func @transform_1(%arg0: i32) -> (i32, i32) {
    %c0_i32 = arith.constant 0 : i32
    %c0_i32_0 = arith.constant 0 : i32
    %c0_i32_1 = arith.constant 0 : i32
    return %c0_i32, %c0_i32_0 : i32, i32
  }
  func.func @transform_2(%arg0: i32) -> (i32, i32) {
    %c0_i32 = arith.constant 0 : i32
    %c0_i32_0 = arith.constant 0 : i32
    %c0_i32_1 = arith.constant 0 : i32
    return %c0_i32, %c0_i32_0 : i32, i32
  }
  func.func @transform_3(%arg0: i32) -> (i32, i32) {
    %c0_i32 = arith.constant 0 : i32
    %c0_i32_0 = arith.constant 0 : i32
    return %c0_i32, %arg0 : i32, i32
  }
  func.func @transform_4(%arg0: i32) -> (i32, i32) {
    %c0_i32 = arith.constant 0 : i32
    %c0_i32_0 = arith.constant 0 : i32
    return %c0_i32, %arg0 : i32, i32
  }
  func.func @transform_5(%arg0: i32) -> (i32, i32) {
    %c0_i32 = arith.constant 0 : i32
    %c0_i32_0 = arith.constant 0 : i32
    return %c0_i32, %arg0 : i32, i32
  }
}

</mosaic_0001>

<llo_original>
// kernel: tpu_custom_call.1
$region0: #{tpu_custom_call.1}
  #allocation0 [shape = 'u32[]', space=smem, size = 0x4, offset = 0x4, fixed_abs, tag = 'smem constant byte address 0x4 - core index']
  #allocation1 [shape = 'u32[144,128]{1,0:T(1,128)}', space=vmem, size = 0x12000, scoped, tag = 'internal scratch']
  %s0 = inlined_call_operand.hbm [shape: f32[900,512], index: 0, kind: input, shape index: {}]
  %s1 = inlined_call_operand.vmem [shape: f32[128,900], index: 1, kind: input, shape index: {}]
  %s2 = inlined_call_operand.vmem [shape: f32[128,1], index: 2, kind: input, shape index: {}]
  %s3 = inlined_call_operand.hbm [shape: f32[32,512], index: 3, kind: input, shape index: {}]
  %s4 = inlined_call_operand.hbm [shape: f32[32,512], index: 4, kind: output, shape index: {0}]
  %s5 = inlined_call_operand.hbm [shape: f32[32,512], index: 5, kind: output, shape index: {1}]
  %6 = xla_tuple %s4, %s5
  %s7 = sld [smem:[#allocation0]]
  $region65: #{tpu_custom_call.1} parent=0
    _
  %s9 = ssub.s32 1, %s7
  %s10 = scalar_select 0, %s9, %s7
  $region1: #{tpu_custom_call.1} parent=0
    #allocation2 [shape = 'u8[1851392]{0}', space=vmem, size = 0x1c4000, scoped, tag = 'input window, operand 0']
    #allocation3 [shape = 's32[2]{0}', space=sflag, size = 0x8, scoped, tag = 'scoped memory for tpu_custom_call.1']
    #allocation4 [shape = 's32[2]{0}', space=sflag, size = 0x8, scoped, tag = 'scoped memory for tpu_custom_call.1']
    #allocation5 [shape = 'u8[65536]{0}', space=vmem, size = 0x10000, scoped, tag = 'input window, operand 3']
    #allocation6 [shape = 's32[2]{0}', space=sflag, size = 0x8, scoped, tag = 'scoped memory for tpu_custom_call.1']
    #allocation7 [shape = 'u8[65536]{0}', space=vmem, size = 0x10000, scoped, tag = 'output window, operand 0']
    #allocation8 [shape = 'u8[65536]{0}', space=vmem, size = 0x10000, scoped, tag = 'output window, operand 1']
    #allocation9 [shape = 's32[2]{0}', space=sflag, size = 0x8, scoped, tag = 'scoped memory for tpu_custom_call.1']
    %11 = vsyncpa [#allocation3], 0
    %s12 = scalar_lea.sflag [#allocation3], 1
    %13 = vsyncpa %s12, 0
    %14 = vsyncpa [#allocation6], 0
    %s15 = scalar_lea.sflag [#allocation6], 1
    %16 = vsyncpa %s15, 0
    %17 = vsyncpa [#allocation4], 0
    %s18 = scalar_lea.sflag [#allocation4], 1
    %19 = vsyncpa %s18, 0
    %20 = vsyncpa [#allocation9], 0
    %s21 = scalar_lea.sflag [#allocation9], 1
    %22 = vsyncpa %s21, 0
    loop: start=0, step=1, limit=4
    $region2: #{tpu_custom_call.1} parent=1 // loop_pre_header
      _
    $region3: #{tpu_custom_call.1} parent=1 // loop_header
      %s24 = sphi 0, %s28
      %p25 = scmp.ge.s32.totalorder %s24, 4
      %s34 = sphi 0, %s36
      %s37 = sphi 0, %s34
      %s38 = sphi 0, %s37
      %s54 = sphi 0, %s38
      %s58 = sphi 0, %s58
      %s60 = sphi 0, %s58
      %s61 = sphi 0, %s60
      %s75 = sphi 0, %s61
      %s79 = sphi 0, %s79
      %s81 = sphi 0, %s79
      %s82 = sphi 0, %s81
      %s96 = sphi 0, %s82
      %s102 = sphi 0, %s104
      %s105 = sphi 0, %s102
      %s106 = sphi 0, %s105
      %s122 = sphi 0, %s106
      %s128 = sphi 0, %s130
      %s131 = sphi 0, %s128
      %s132 = sphi 0, %s131
      %s148 = sphi 0, %s132
      %s154 = sphi 0, %s156
      %s157 = sphi 0, %s154
      %s158 = sphi 0, %s157
      %s174 = sphi 0, %s158
    $region4: #{tpu_custom_call.1} parent=1 // loop_header_branch
      %27 = sbr.rel (%p25) target = $region8
    $region5: #{tpu_custom_call.1} parent=1 // loop_body
      %s29 = ssub.s32 %s24, 1
      %s30 = ssub.s32 %s24, 2
      %s31 = sadd.s32 %s24, 1
      %s32 = ssub.s32 %s24, %s31
      %p33 = scmp.eq.s32.totalorder %s32, 0
      %s35 = sadd.s32 %s34, 1
      %s36 = scalar_select %p33, %s34, %s35
      %p39 = pneg %p33
      %p40 = scmp.eq.s32.totalorder %s24, 1
      %p41 = por %p39, %p40
      %p42 = scmp.ne.s32.totalorder %s34, %s37
      %p43 = scmp.eq.s32.totalorder %s24, 0
      %p44 = por %p42, %p43
      %p45 = scmp.ne.s32.totalorder %s34, %s37
      %p46 = scmp.eq.s32.totalorder %s29, 1
      %p47 = por %p45, %p46
      %p48 = scmp.ne.s32.totalorder %s37, %s38
      %p49 = scmp.eq.s32.totalorder %s29, 0
      %p50 = por %p48, %p49
      %p51 = scmp.ne.s32.totalorder %s37, %s38
      %p52 = scmp.eq.s32.totalorder %s30, 1
      %p53 = por %p51, %p52
      %p55 = scmp.ne.s32.totalorder %s38, %s54
      %p56 = scmp.eq.s32.totalorder %s30, 0
      %p57 = por %p55, %p56
      %s59 = sadd.s32 %s58, 1
      %p62 = scmp.eq.s32.totalorder %s24, 1
      %p63 = scmp.ne.s32.totalorder %s58, %s60
      %p64 = scmp.eq.s32.totalorder %s24, 0
      %p65 = por %p63, %p64
      %p66 = scmp.ne.s32.totalorder %s58, %s60
      %p67 = scmp.eq.s32.totalorder %s29, 1
      %p68 = por %p66, %p67
      %p69 = scmp.ne.s32.totalorder %s60, %s61
      %p70 = scmp.eq.s32.totalorder %s29, 0
      %p71 = por %p69, %p70
      %p72 = scmp.ne.s32.totalorder %s60, %s61
      %p73 = scmp.eq.s32.totalorder %s30, 1
      %p74 = por %p72, %p73
      %p76 = scmp.ne.s32.totalorder %s61, %s75
      %p77 = scmp.eq.s32.totalorder %s30, 0
      %p78 = por %p76, %p77
      %s80 = sadd.s32 %s79, 1
      %p83 = scmp.eq.s32.totalorder %s24, 1
      %p84 = scmp.ne.s32.totalorder %s79, %s81
      %p85 = scmp.eq.s32.totalorder %s24, 0
      %p86 = por %p84, %p85
      %p87 = scmp.ne.s32.totalorder %s79, %s81
      %p88 = scmp.eq.s32.totalorder %s29, 1
      %p89 = por %p87, %p88
      %p90 = scmp.ne.s32.totalorder %s81, %s82
      %p91 = scmp.eq.s32.totalorder %s29, 0
      %p92 = por %p90, %p91
      %p93 = scmp.ne.s32.totalorder %s81, %s82
      %p94 = scmp.eq.s32.totalorder %s30, 1
      %p95 = por %p93, %p94
      %p97 = scmp.ne.s32.totalorder %s82, %s96
      %p98 = scmp.eq.s32.totalorder %s30, 0
      %p99 = por %p97, %p98
      %s100 = ssub.s32 %s24, %s31
      %p101 = scmp.eq.s32.totalorder %s100, 0
      %s103 = sadd.s32 %s102, 1
      %s104 = scalar_select %p101, %s102, %s103
      %p107 = pneg %p101
      %p108 = scmp.eq.s32.totalorder %s24, 1
      %p109 = por %p107, %p108
      %p110 = scmp.ne.s32.totalorder %s102, %s105
      %p111 = scmp.eq.s32.totalorder %s24, 0
      %p112 = por %p110, %p111
      %p113 = scmp.ne.s32.totalorder %s102, %s105
      %p114 = scmp.eq.s32.totalorder %s29, 1
      %p115 = por %p113, %p114
      %p116 = scmp.ne.s32.totalorder %s105, %s106
      %p117 = scmp.eq.s32.totalorder %s29, 0
      %p118 = por %p116, %p117
      %p119 = scmp.ne.s32.totalorder %s105, %s106
      %p120 = scmp.eq.s32.totalorder %s30, 1
      %p121 = por %p119, %p120
      %p123 = scmp.ne.s32.totalorder %s106, %s122
      %p124 = scmp.eq.s32.totalorder %s30, 0
      %p125 = por %p123, %p124
      %s126 = ssub.s32 %s24, %s31
      %p127 = scmp.eq.s32.totalorder %s126, 0
      %s129 = sadd.s32 %s128, 1
      %s130 = scalar_select %p127, %s128, %s129
      %p133 = pneg %p127
      %p134 = scmp.eq.s32.totalorder %s24, 1
      %p135 = por %p133, %p134
      %p136 = scmp.ne.s32.totalorder %s128, %s131
      %p137 = scmp.eq.s32.totalorder %s24, 0
      %p138 = por %p136, %p137
      %p139 = scmp.ne.s32.totalorder %s128, %s131
      %p140 = scmp.eq.s32.totalorder %s29, 1
      %p141 = por %p139, %p140
      %p142 = scmp.ne.s32.totalorder %s131, %s132
      %p143 = scmp.eq.s32.totalorder %s29, 0
      %p144 = por %p142, %p143
      %p145 = scmp.ne.s32.totalorder %s131, %s132
      %p146 = scmp.eq.s32.totalorder %s30, 1
      %p147 = por %p145, %p146
      %p149 = scmp.ne.s32.totalorder %s132, %s148
      %p150 = scmp.eq.s32.totalorder %s30, 0
      %p151 = por %p149, %p150
      %s152 = ssub.s32 %s24, %s31
      %p153 = scmp.eq.s32.totalorder %s152, 0
      %s155 = sadd.s32 %s154, 1
      %s156 = scalar_select %p153, %s154, %s155
      %p159 = pneg %p153
      %p160 = scmp.eq.s32.totalorder %s24, 1
      %p161 = por %p159, %p160
      %p162 = scmp.ne.s32.totalorder %s154, %s157
      %p163 = scmp.eq.s32.totalorder %s24, 0
      %p164 = por %p162, %p163
      %p165 = scmp.ne.s32.totalorder %s154, %s157
      %p166 = scmp.eq.s32.totalorder %s29, 1
      %p167 = por %p165, %p166
      %p168 = scmp.ne.s32.totalorder %s157, %s158
      %p169 = scmp.eq.s32.totalorder %s29, 0
      %p170 = por %p168, %p169
      %p171 = scmp.ne.s32.totalorder %s157, %s158
      %p172 = scmp.eq.s32.totalorder %s30, 1
      %p173 = por %p171, %p172
      %p175 = scmp.ne.s32.totalorder %s158, %s174
      %p176 = scmp.eq.s32.totalorder %s30, 0
      %p177 = por %p175, %p176
      %p178 = scmp.le.s32.totalorder 1, %s24
      %p179 = scmp.lt.s32.totalorder %s24, 3
      %p180 = pnand %p178, %p179
      %p181 = pneg %p180
      // Predicated region
      $region9: #{tpu_custom_call.1} parent=5 // pred_check
        _
      $region10: #{tpu_custom_call.1} parent=5 // pred_check_branch
        %183 = sbr.rel (%p180) target = $region12
      $region11: #{tpu_custom_call.1} parent=5 // pred_region
        %s184 = ssub.s32 %s24, 1
        // Predicated region
        $region13: #{tpu_custom_call.1} parent=11 // pred_check
          %p185 = pneg %p71
        $region14: #{tpu_custom_call.1} parent=11 // pred_check_branch
          %187 = sbr.rel (%p185) target = $region16
        $region15: #{tpu_custom_call.1} parent=11 // pred_region
          _
        $region16: #{tpu_custom_call.1} parent=11 // pred_fallthru
          _
        // Predicated region
        $region17: #{tpu_custom_call.1} parent=11 // pred_check
          %p188 = pneg %p92
        $region18: #{tpu_custom_call.1} parent=11 // pred_check_branch
          %190 = sbr.rel (%p188) target = $region20
        $region19: #{tpu_custom_call.1} parent=11 // pred_region
          _
        $region20: #{tpu_custom_call.1} parent=11 // pred_fallthru
          _
      $region12: #{tpu_custom_call.1} parent=5 // pred_fallthru
        _
      %p191 = scmp.lt.s32.totalorder %s24, 2
      // Predicated region
      $region21: #{tpu_custom_call.1} parent=5 // pred_check
        %p192 = pneg %p191
      $region22: #{tpu_custom_call.1} parent=5 // pred_check_branch
        %194 = sbr.rel (%p192) target = $region24
      $region23: #{tpu_custom_call.1} parent=5 // pred_region
        // Predicated region
        $region25: #{tpu_custom_call.1} parent=23 // pred_check
          %p195 = pneg %p44
        $region26: #{tpu_custom_call.1} parent=23 // pred_check_branch
          %197 = sbr.rel (%p195) target = $region28
        $region27: #{tpu_custom_call.1} parent=23 // pred_region
          %s198 = sand.u32 %s34, 1
          %s199 = scalar_lea.sflag [#allocation3], %s198
          %s200 = sand.u32 %s34, 1
          %s201 = smul.addr %s200, 1808
          %s202 = scalar_lea.vmem [#allocation2], %s201
          %s203 = smul.u32 2, %s24
          %s205 = ssub.s32 28928, 28928
          %206 = vsyncadd %s199, %s205
          %s207 = smul.addr %s203, 128
          %s208 = scalar_lea.hbm %s0, %s207
          %s209 = sshll.u32 %s202, 4
          %s210 = int_to_ptr.vmem [resolvable:$true] %s209
          %215 = dma.hbm_to_vmem [thread:$0]  %s208, 28928, %s210, %s199, 512, 256, 16
        $region28: #{tpu_custom_call.1} parent=23 // pred_fallthru
          _
        // Predicated region
        $region29: #{tpu_custom_call.1} parent=23 // pred_check
          %p216 = pneg %p112
        $region30: #{tpu_custom_call.1} parent=23 // pred_check_branch
          %218 = sbr.rel (%p216) target = $region32
        $region31: #{tpu_custom_call.1} parent=23 // pred_region
          %s219 = sand.u32 %s102, 1
          %s220 = scalar_lea.sflag [#allocation6], %s219
          %s221 = sand.u32 %s102, 1
          %s222 = smul.addr %s221, 64
          %s223 = scalar_lea.vmem [#allocation5], %s222
          %s224 = smul.u32 2, %s24
          %s226 = ssub.s32 1024, 1024
          %227 = vsyncadd %s220, %s226
          %s228 = smul.addr %s224, 128
          %s229 = scalar_lea.hbm %s3, %s228
          %s230 = sshll.u32 %s223, 4
          %s231 = int_to_ptr.vmem [resolvable:$true] %s230
          %236 = dma.hbm_to_vmem [thread:$0]  %s229, 1024, %s231, %s220, 512, 256, 16
        $region32: #{tpu_custom_call.1} parent=23 // pred_fallthru
          _
      $region24: #{tpu_custom_call.1} parent=5 // pred_fallthru
        _
      %p237 = scmp.le.s32.totalorder 1, %s24
      %p238 = scmp.lt.s32.totalorder %s24, 3
      %p239 = pnand %p237, %p238
      %p240 = pneg %p239
      // Predicated region
      $region33: #{tpu_custom_call.1} parent=5 // pred_check
        _
      $region34: #{tpu_custom_call.1} parent=5 // pred_check_branch
        %242 = sbr.rel (%p239) target = $region36
      $region35: #{tpu_custom_call.1} parent=5 // pred_region
        %s243 = ssub.s32 %s24, 1
        %s244 = sand.u32 %s37, 1
        %s245 = scalar_lea.sflag [#allocation3], %s244
        %s246 = sand.u32 %s37, 1
        %s247 = smul.addr %s246, 1808
        %s248 = scalar_lea.vmem [#allocation2], %s247
        // Predicated region
        $region37: #{tpu_custom_call.1} parent=35 // pred_check
          %p249 = pneg %p50
        $region38: #{tpu_custom_call.1} parent=35 // pred_check_branch
          %251 = sbr.rel (%p249) target = $region40
        $region39: #{tpu_custom_call.1} parent=35 // pred_region
          %252 = dma.done %s245, 28928
        $region40: #{tpu_custom_call.1} parent=35 // pred_fallthru
          _
        %s253 = sand.u32 %s105, 1
        %s254 = scalar_lea.sflag [#allocation6], %s253
        %s255 = sand.u32 %s105, 1
        %s256 = smul.addr %s255, 64
        %s257 = scalar_lea.vmem [#allocation5], %s256
        // Predicated region
        $region41: #{tpu_custom_call.1} parent=35 // pred_check
          %p258 = pneg %p118
        $region42: #{tpu_custom_call.1} parent=35 // pred_check_branch
          %260 = sbr.rel (%p258) target = $region44
        $region43: #{tpu_custom_call.1} parent=35 // pred_region
          %261 = dma.done %s254, 1024
        $region44: #{tpu_custom_call.1} parent=35 // pred_fallthru
          _
        %s262 = sand.u32 %s37, 1
        %s263 = scalar_lea.sflag [#allocation3], %s262
        %s264 = sand.u32 %s37, 1
        %s265 = smul.addr %s264, 1808
        %s266 = scalar_lea.vmem [#allocation2], %s265
        %p267 = pneg %p50
        %p268 = pneg %p47
        %p269 = pneg %p71
        %p270 = pneg %p68
        %p271 = pneg %p92
        %p272 = pneg %p89
        %s273 = sand.u32 %s105, 1
        %s274 = scalar_lea.sflag [#allocation6], %s273
        %s275 = sand.u32 %s105, 1
        %s276 = smul.addr %s275, 64
        %s277 = scalar_lea.vmem [#allocation5], %s276
        %p278 = pneg %p118
        %p279 = pneg %p115
        %p280 = pneg %p144
        %p281 = pneg %p141
        %s282 = sand.u32 %s131, 1
        %s283 = scalar_lea.sflag [#allocation4], %s282
        %s284 = sand.u32 %s131, 1
        %s285 = smul.addr %s284, 64
        %s286 = scalar_lea.vmem [#allocation7], %s285
        %p287 = pneg %p170
        %p288 = pneg %p167
        %s289 = sand.u32 %s157, 1
        %s290 = scalar_lea.sflag [#allocation9], %s289
        %s291 = sand.u32 %s157, 1
        %s292 = smul.addr %s291, 64
        %s293 = scalar_lea.vmem [#allocation8], %s292
        %s294 = smul.u32 2, %s29
        %s295 = smul.u32 2, %s29
        %s296 = smul.u32 2, %s29
        %s297 = smul.u32 2, %s29
        %v298 = vld [vmem:[%s1] sm:$0xff]
        %v299 = vld [vmem:[%s1 + $0x8] sm:$0xff]
        %v300 = vld [vmem:[%s1 + $0x10] sm:$0xff]
        %v301 = vld [vmem:[%s1 + $0x18] sm:$0xff]
        %v302 = vld [vmem:[%s1 + $0x20] sm:$0xff]
        %v303 = vld [vmem:[%s1 + $0x28] sm:$0xff]
        %v304 = vld [vmem:[%s1 + $0x30] sm:$0xff]
        %v305 = vld [vmem:[%s1 + $0x38] sm:$0xff]
        %v306 = vld [vmem:[%s1 + $0x40] sm:$0xff]
        %v307 = vld [vmem:[%s1 + $0x48] sm:$0xff]
        %v308 = vld [vmem:[%s1 + $0x50] sm:$0xff]
        %v309 = vld [vmem:[%s1 + $0x58] sm:$0xff]
        %v310 = vld [vmem:[%s1 + $0x60] sm:$0xff]
        %v311 = vld [vmem:[%s1 + $0x68] sm:$0xff]
        %v312 = vld [vmem:[%s1 + $0x70] sm:$0xff]
        %v313 = vld [vmem:[%s1 + $0x78] sm:$0xff]
        %v314 = vld [vmem:[%s1 + $0x80] sm:$0xff]
        %v315 = vld [vmem:[%s1 + $0x88] sm:$0xff]
        %v316 = vld [vmem:[%s1 + $0x90] sm:$0xff]
        %v317 = vld [vmem:[%s1 + $0x98] sm:$0xff]
        %v318 = vld [vmem:[%s1 + $0xa0] sm:$0xff]
        %v319 = vld [vmem:[%s1 + $0xa8] sm:$0xff]
        %v320 = vld [vmem:[%s1 + $0xb0] sm:$0xff]
        %v321 = vld [vmem:[%s1 + $0xb8] sm:$0xff]
        %v322 = vld [vmem:[%s1 + $0xc0] sm:$0xff]
        %v323 = vld [vmem:[%s1 + $0xc8] sm:$0xff]
        %v324 = vld [vmem:[%s1 + $0xd0] sm:$0xff]
        %v325 = vld [vmem:[%s1 + $0xd8] sm:$0xff]
        %v326 = vld [vmem:[%s1 + $0xe0] sm:$0xff]
        %v327 = vld [vmem:[%s1 + $0xe8] sm:$0xff]
        %v328 = vld [vmem:[%s1 + $0xf0] sm:$0xff]
        %v329 = vld [vmem:[%s1 + $0xf8] sm:$0xff]
        %v330 = vld [vmem:[%s1 + $0x100] sm:$0xff]
        %v331 = vld [vmem:[%s1 + $0x108] sm:$0xff]
        %v332 = vld [vmem:[%s1 + $0x110] sm:$0xff]
        %v333 = vld [vmem:[%s1 + $0x118] sm:$0xff]
        %v334 = vld [vmem:[%s1 + $0x120] sm:$0xff]
        %v335 = vld [vmem:[%s1 + $0x128] sm:$0xff]
        %v336 = vld [vmem:[%s1 + $0x130] sm:$0xff]
        %v337 = vld [vmem:[%s1 + $0x138] sm:$0xff]
        %v338 = vld [vmem:[%s1 + $0x140] sm:$0xff]
        %v339 = vld [vmem:[%s1 + $0x148] sm:$0xff]
        %v340 = vld [vmem:[%s1 + $0x150] sm:$0xff]
        %v341 = vld [vmem:[%s1 + $0x158] sm:$0xff]
        %v342 = vld [vmem:[%s1 + $0x160] sm:$0xff]
        %v343 = vld [vmem:[%s1 + $0x168] sm:$0xff]
        %v344 = vld [vmem:[%s1 + $0x170] sm:$0xff]
        %v345 = vld [vmem:[%s1 + $0x178] sm:$0xff]
        %v346 = vld [vmem:[%s1 + $0x180] sm:$0xff]
        %v347 = vld [vmem:[%s1 + $0x188] sm:$0xff]
        %v348 = vld [vmem:[%s1 + $0x190] sm:$0xff]
        %v349 = vld [vmem:[%s1 + $0x198] sm:$0xff]
        %v350 = vld [vmem:[%s1 + $0x1a0] sm:$0xff]
        %v351 = vld [vmem:[%s1 + $0x1a8] sm:$0xff]
        %v352 = vld [vmem:[%s1 + $0x1b0] sm:$0xff]
        %v353 = vld [vmem:[%s1 + $0x1b8] sm:$0xff]
        %v354 = vld [vmem:[%s1 + $0x1c0] sm:$0xff]
        %v355 = vld [vmem:[%s1 + $0x1c8] sm:$0xff]
        %v356 = vld [vmem:[%s1 + $0x1d0] sm:$0xff]
        %v357 = vld [vmem:[%s1 + $0x1d8] sm:$0xff]
        %v358 = vld [vmem:[%s1 + $0x1e0] sm:$0xff]
        %v359 = vld [vmem:[%s1 + $0x1e8] sm:$0xff]
        %v360 = vld [vmem:[%s1 + $0x1f0] sm:$0xff]
        %v361 = vld [vmem:[%s1 + $0x1f8] sm:$0xff]
        %v362 = vld [vmem:[%s1 + $0x200] sm:$0xff]
        %v363 = vld [vmem:[%s1 + $0x208] sm:$0xff]
        %v364 = vld [vmem:[%s1 + $0x210] sm:$0xff]
        %v365 = vld [vmem:[%s1 + $0x218] sm:$0xff]
        %v366 = vld [vmem:[%s1 + $0x220] sm:$0xff]
        %v367 = vld [vmem:[%s1 + $0x228] sm:$0xff]
        %v368 = vld [vmem:[%s1 + $0x230] sm:$0xff]
        %v369 = vld [vmem:[%s1 + $0x238] sm:$0xff]
        %v370 = vld [vmem:[%s1 + $0x240] sm:$0xff]
        %v371 = vld [vmem:[%s1 + $0x248] sm:$0xff]
        %v372 = vld [vmem:[%s1 + $0x250] sm:$0xff]
        %v373 = vld [vmem:[%s1 + $0x258] sm:$0xff]
        %v374 = vld [vmem:[%s1 + $0x260] sm:$0xff]
        %v375 = vld [vmem:[%s1 + $0x268] sm:$0xff]
        %v376 = vld [vmem:[%s1 + $0x270] sm:$0xff]
        %v377 = vld [vmem:[%s1 + $0x278] sm:$0xff]
        %v378 = vld [vmem:[%s1 + $0x280] sm:$0xff]
        %v379 = vld [vmem:[%s1 + $0x288] sm:$0xff]
        %v380 = vld [vmem:[%s1 + $0x290] sm:$0xff]
        %v381 = vld [vmem:[%s1 + $0x298] sm:$0xff]
        %v382 = vld [vmem:[%s1 + $0x2a0] sm:$0xff]
        %v383 = vld [vmem:[%s1 + $0x2a8] sm:$0xff]
        %v384 = vld [vmem:[%s1 + $0x2b0] sm:$0xff]
        %v385 = vld [vmem:[%s1 + $0x2b8] sm:$0xff]
        %v386 = vld [vmem:[%s1 + $0x2c0] sm:$0xff]
        %v387 = vld [vmem:[%s1 + $0x2c8] sm:$0xff]
        %v388 = vld [vmem:[%s1 + $0x2d0] sm:$0xff]
        %v389 = vld [vmem:[%s1 + $0x2d8] sm:$0xff]
        %v390 = vld [vmem:[%s1 + $0x2e0] sm:$0xff]
        %v391 = vld [vmem:[%s1 + $0x2e8] sm:$0xff]
        %v392 = vld [vmem:[%s1 + $0x2f0] sm:$0xff]
        %v393 = vld [vmem:[%s1 + $0x2f8] sm:$0xff]
        %v394 = vld [vmem:[%s1 + $0x300] sm:$0xff]
        %v395 = vld [vmem:[%s1 + $0x308] sm:$0xff]
        %v396 = vld [vmem:[%s1 + $0x310] sm:$0xff]
        %v397 = vld [vmem:[%s1 + $0x318] sm:$0xff]
        %v398 = vld [vmem:[%s1 + $0x320] sm:$0xff]
        %v399 = vld [vmem:[%s1 + $0x328] sm:$0xff]
        %v400 = vld [vmem:[%s1 + $0x330] sm:$0xff]
        %v401 = vld [vmem:[%s1 + $0x338] sm:$0xff]
        %v402 = vld [vmem:[%s1 + $0x340] sm:$0xff]
        %v403 = vld [vmem:[%s1 + $0x348] sm:$0xff]
        %v404 = vld [vmem:[%s1 + $0x350] sm:$0xff]
        %v405 = vld [vmem:[%s1 + $0x358] sm:$0xff]
        %v406 = vld [vmem:[%s1 + $0x360] sm:$0xff]
        %v407 = vld [vmem:[%s1 + $0x368] sm:$0xff]
        %v408 = vld [vmem:[%s1 + $0x370] sm:$0xff]
        %v409 = vld [vmem:[%s1 + $0x378] sm:$0xff]
        %v410 = vld [vmem:[%s1 + $0x380] sm:$0xff]
        %v411 = vld [vmem:[%s1 + $0x388] sm:$0xff]
        %v412 = vld [vmem:[%s1 + $0x390] sm:$0xff]
        %v413 = vld [vmem:[%s1 + $0x398] sm:$0xff]
        %v414 = vld [vmem:[%s1 + $0x3a0] sm:$0xff]
        %v415 = vld [vmem:[%s1 + $0x3a8] sm:$0xff]
        %v416 = vld [vmem:[%s1 + $0x3b0] sm:$0xff]
        %v417 = vld [vmem:[%s1 + $0x3b8] sm:$0xff]
        %v418 = vld [vmem:[%s1 + $0x3c0] sm:$0xff]
        %v419 = vld [vmem:[%s1 + $0x3c8] sm:$0xff]
        %v420 = vld [vmem:[%s1 + $0x3d0] sm:$0xff]
        %v421 = vld [vmem:[%s1 + $0x3d8] sm:$0xff]
        %v422 = vld [vmem:[%s1 + $0x3e0] sm:$0xff]
        %v423 = vld [vmem:[%s1 + $0x3e8] sm:$0xff]
        %v424 = vld [vmem:[%s1 + $0x3f0] sm:$0xff]
        %v425 = vld [vmem:[%s1 + $0x3f8] sm:$0xff]
        %v426 = vld [vmem:[%s248] sm:$0xff]
        %v427 = vld [vmem:[%s248 + $0x8] sm:$0xff]
        %v428 = vld [vmem:[%s248 + $0x10] sm:$0xff]
        %v429 = vld [vmem:[%s248 + $0x18] sm:$0xff]
        %v430 = vld [vmem:[%s248 + $0x20] sm:$0xff]
        %v431 = vld [vmem:[%s248 + $0x28] sm:$0xff]
        %v432 = vld [vmem:[%s248 + $0x30] sm:$0xff]
        %v433 = vld [vmem:[%s248 + $0x38] sm:$0xff]
        %v434 = vld [vmem:[%s248 + $0x40] sm:$0xff]
        %v435 = vld [vmem:[%s248 + $0x48] sm:$0xff]
        %v436 = vld [vmem:[%s248 + $0x50] sm:$0xff]
        %v437 = vld [vmem:[%s248 + $0x58] sm:$0xff]
        %v438 = vld [vmem:[%s248 + $0x60] sm:$0xff]
        %v439 = vld [vmem:[%s248 + $0x68] sm:$0xff]
        %v440 = vld [vmem:[%s248 + $0x70] sm:$0xff]
        %v441 = vld [vmem:[%s248 + $0x78] sm:$0xff]
        %v442 = vld [vmem:[%s248 + $0x80] sm:$0xff]
        %v443 = vld [vmem:[%s248 + $0x88] sm:$0xff]
        %v444 = vld [vmem:[%s248 + $0x90] sm:$0xff]
        %v445 = vld [vmem:[%s248 + $0x98] sm:$0xff]
        %v446 = vld [vmem:[%s248 + $0xa0] sm:$0xff]
        %v447 = vld [vmem:[%s248 + $0xa8] sm:$0xff]
        %v448 = vld [vmem:[%s248 + $0xb0] sm:$0xff]
        %v449 = vld [vmem:[%s248 + $0xb8] sm:$0xff]
        %v450 = vld [vmem:[%s248 + $0xc0] sm:$0xff]
        %v451 = vld [vmem:[%s248 + $0xc8] sm:$0xff]
        %v452 = vld [vmem:[%s248 + $0xd0] sm:$0xff]
        %v453 = vld [vmem:[%s248 + $0xd8] sm:$0xff]
        %v454 = vld [vmem:[%s248 + $0xe0] sm:$0xff]
        %v455 = vld [vmem:[%s248 + $0xe8] sm:$0xff]
        %v456 = vld [vmem:[%s248 + $0xf0] sm:$0xff]
        %v457 = vld [vmem:[%s248 + $0xf8] sm:$0xff]
        %v458 = vld [vmem:[%s248 + $0x100] sm:$0xff]
        %v459 = vld [vmem:[%s248 + $0x108] sm:$0xff]
        %v460 = vld [vmem:[%s248 + $0x110] sm:$0xff]
        %v461 = vld [vmem:[%s248 + $0x118] sm:$0xff]
        %v462 = vld [vmem:[%s248 + $0x120] sm:$0xff]
        %v463 = vld [vmem:[%s248 + $0x128] sm:$0xff]
        %v464 = vld [vmem:[%s248 + $0x130] sm:$0xff]
        %v465 = vld [vmem:[%s248 + $0x138] sm:$0xff]
        %v466 = vld [vmem:[%s248 + $0x140] sm:$0xff]
        %v467 = vld [vmem:[%s248 + $0x148] sm:$0xff]
        %v468 = vld [vmem:[%s248 + $0x150] sm:$0xff]
        %v469 = vld [vmem:[%s248 + $0x158] sm:$0xff]
        %v470 = vld [vmem:[%s248 + $0x160] sm:$0xff]
        %v471 = vld [vmem:[%s248 + $0x168] sm:$0xff]
        %v472 = vld [vmem:[%s248 + $0x170] sm:$0xff]
        %v473 = vld [vmem:[%s248 + $0x178] sm:$0xff]
        %v474 = vld [vmem:[%s248 + $0x180] sm:$0xff]
        %v475 = vld [vmem:[%s248 + $0x188] sm:$0xff]
        %v476 = vld [vmem:[%s248 + $0x190] sm:$0xff]
        %v477 = vld [vmem:[%s248 + $0x198] sm:$0xff]
        %v478 = vld [vmem:[%s248 + $0x1a0] sm:$0xff]
        %v479 = vld [vmem:[%s248 + $0x1a8] sm:$0xff]
        %v480 = vld [vmem:[%s248 + $0x1b0] sm:$0xff]
        %v481 = vld [vmem:[%s248 + $0x1b8] sm:$0xff]
        %v482 = vld [vmem:[%s248 + $0x1c0] sm:$0xff]
        %v483 = vld [vmem:[%s248 + $0x1c8] sm:$0xff]
        %v484 = vld [vmem:[%s248 + $0x1d0] sm:$0xff]
        %v485 = vld [vmem:[%s248 + $0x1d8] sm:$0xff]
        %v486 = vld [vmem:[%s248 + $0x1e0] sm:$0xff]
        %v487 = vld [vmem:[%s248 + $0x1e8] sm:$0xff]
        %v488 = vld [vmem:[%s248 + $0x1f0] sm:$0xff]
        %v489 = vld [vmem:[%s248 + $0x1f8] sm:$0xff]
        %v490 = vld [vmem:[%s248 + $0x200] sm:$0xff]
        %v491 = vld [vmem:[%s248 + $0x208] sm:$0xff]
        %v492 = vld [vmem:[%s248 + $0x210] sm:$0xff]
        %v493 = vld [vmem:[%s248 + $0x218] sm:$0xff]
        %v494 = vld [vmem:[%s248 + $0x220] sm:$0xff]
        %v495 = vld [vmem:[%s248 + $0x228] sm:$0xff]
        %v496 = vld [vmem:[%s248 + $0x230] sm:$0xff]
        %v497 = vld [vmem:[%s248 + $0x238] sm:$0xff]
        %v498 = vld [vmem:[%s248 + $0x240] sm:$0xff]
        %v499 = vld [vmem:[%s248 + $0x248] sm:$0xff]
        %v500 = vld [vmem:[%s248 + $0x250] sm:$0xff]
        %v501 = vld [vmem:[%s248 + $0x258] sm:$0xff]
        %v502 = vld [vmem:[%s248 + $0x260] sm:$0xff]
        %v503 = vld [vmem:[%s248 + $0x268] sm:$0xff]
        %v504 = vld [vmem:[%s248 + $0x270] sm:$0xff]
        %v505 = vld [vmem:[%s248 + $0x278] sm:$0xff]
        %v506 = vld [vmem:[%s248 + $0x280] sm:$0xff]
        %v507 = vld [vmem:[%s248 + $0x288] sm:$0xff]
        %v508 = vld [vmem:[%s248 + $0x290] sm:$0xff]
        %v509 = vld [vmem:[%s248 + $0x298] sm:$0xff]
        %v510 = vld [vmem:[%s248 + $0x2a0] sm:$0xff]
        %v511 = vld [vmem:[%s248 + $0x2a8] sm:$0xff]
        %v512 = vld [vmem:[%s248 + $0x2b0] sm:$0xff]
        %v513 = vld [vmem:[%s248 + $0x2b8] sm:$0xff]
        %v514 = vld [vmem:[%s248 + $0x2c0] sm:$0xff]
        %v515 = vld [vmem:[%s248 + $0x2c8] sm:$0xff]
        %v516 = vld [vmem:[%s248 + $0x2d0] sm:$0xff]
        %v517 = vld [vmem:[%s248 + $0x2d8] sm:$0xff]
        %v518 = vld [vmem:[%s248 + $0x2e0] sm:$0xff]
        %v519 = vld [vmem:[%s248 + $0x2e8] sm:$0xff]
        %v520 = vld [vmem:[%s248 + $0x2f0] sm:$0xff]
        %v521 = vld [vmem:[%s248 + $0x2f8] sm:$0xff]
        %v522 = vld [vmem:[%s248 + $0x300] sm:$0xff]
        %v523 = vld [vmem:[%s248 + $0x308] sm:$0xff]
        %v524 = vld [vmem:[%s248 + $0x310] sm:$0xff]
        %v525 = vld [vmem:[%s248 + $0x318] sm:$0xff]
        %v526 = vld [vmem:[%s248 + $0x320] sm:$0xff]
        %v527 = vld [vmem:[%s248 + $0x328] sm:$0xff]
        %v528 = vld [vmem:[%s248 + $0x330] sm:$0xff]
        %v529 = vld [vmem:[%s248 + $0x338] sm:$0xff]
        %v530 = vld [vmem:[%s248 + $0x340] sm:$0xff]
        %v531 = vld [vmem:[%s248 + $0x348] sm:$0xff]
        %v532 = vld [vmem:[%s248 + $0x350] sm:$0xff]
        %v533 = vld [vmem:[%s248 + $0x358] sm:$0xff]
        %v534 = vld [vmem:[%s248 + $0x360] sm:$0xff]
        %v535 = vld [vmem:[%s248 + $0x368] sm:$0xff]
        %v536 = vld [vmem:[%s248 + $0x370] sm:$0xff]
        %v537 = vld [vmem:[%s248 + $0x378] sm:$0xff]
        %v538 = vld [vmem:[%s248 + $0x380] sm:$0xff]
        %v539 = vld [vmem:[%s248 + $0x388] sm:$0xff]
        %v540 = vld [vmem:[%s248 + $0x390] sm:$0xff]
        %v541 = vld [vmem:[%s248 + $0x398] sm:$0xff]
        %v542 = vld [vmem:[%s248 + $0x3a0] sm:$0xff]
        %v543 = vld [vmem:[%s248 + $0x3a8] sm:$0xff]
        %v544 = vld [vmem:[%s248 + $0x3b0] sm:$0xff]
        %v545 = vld [vmem:[%s248 + $0x3b8] sm:$0xff]
        %v546 = vld [vmem:[%s248 + $0x3c0] sm:$0xff]
        %v547 = vld [vmem:[%s248 + $0x3c8] sm:$0xff]
        %v548 = vld [vmem:[%s248 + $0x3d0] sm:$0xff]
        %v549 = vld [vmem:[%s248 + $0x3d8] sm:$0xff]
        %v550 = vld [vmem:[%s248 + $0x3e0] sm:$0xff]
        %v551 = vld [vmem:[%s248 + $0x3e8] sm:$0xff]
        %v552 = vld [vmem:[%s248 + $0x3f0] sm:$0xff]
        %v553 = vld [vmem:[%s248 + $0x3f8] sm:$0xff]
        %v554 = vld [vmem:[%s248 + $0x400] sm:$0xff]
        %v555 = vld [vmem:[%s248 + $0x408] sm:$0xff]
        %v556 = vld [vmem:[%s248 + $0x410] sm:$0xff]
        %v557 = vld [vmem:[%s248 + $0x418] sm:$0xff]
        %v558 = vld [vmem:[%s248 + $0x420] sm:$0xff]
        %v559 = vld [vmem:[%s248 + $0x428] sm:$0xff]
        %v560 = vld [vmem:[%s248 + $0x430] sm:$0xff]
        %v561 = vld [vmem:[%s248 + $0x438] sm:$0xff]
        %v562 = vld [vmem:[%s248 + $0x440] sm:$0xff]
        %v563 = vld [vmem:[%s248 + $0x448] sm:$0xff]
        %v564 = vld [vmem:[%s248 + $0x450] sm:$0xff]
        %v565 = vld [vmem:[%s248 + $0x458] sm:$0xff]
        %v566 = vld [vmem:[%s248 + $0x460] sm:$0xff]
        %v567 = vld [vmem:[%s248 + $0x468] sm:$0xff]
        %v568 = vld [vmem:[%s248 + $0x470] sm:$0xff]
        %v569 = vld [vmem:[%s248 + $0x478] sm:$0xff]
        %v570 = vld [vmem:[%s248 + $0x480] sm:$0xff]
        %v571 = vld [vmem:[%s248 + $0x488] sm:$0xff]
        %v572 = vld [vmem:[%s248 + $0x490] sm:$0xff]
        %v573 = vld [vmem:[%s248 + $0x498] sm:$0xff]
        %v574 = vld [vmem:[%s248 + $0x4a0] sm:$0xff]
        %v575 = vld [vmem:[%s248 + $0x4a8] sm:$0xff]
        %v576 = vld [vmem:[%s248 + $0x4b0] sm:$0xff]
        %v577 = vld [vmem:[%s248 + $0x4b8] sm:$0xff]
        %v578 = vld [vmem:[%s248 + $0x4c0] sm:$0xff]
        %v579 = vld [vmem:[%s248 + $0x4c8] sm:$0xff]
        %v580 = vld [vmem:[%s248 + $0x4d0] sm:$0xff]
        %v581 = vld [vmem:[%s248 + $0x4d8] sm:$0xff]
        %v582 = vld [vmem:[%s248 + $0x4e0] sm:$0xff]
        %v583 = vld [vmem:[%s248 + $0x4e8] sm:$0xff]
        %v584 = vld [vmem:[%s248 + $0x4f0] sm:$0xff]
        %v585 = vld [vmem:[%s248 + $0x4f8] sm:$0xff]
        %v586 = vld [vmem:[%s248 + $0x500] sm:$0xff]
        %v587 = vld [vmem:[%s248 + $0x508] sm:$0xff]
        %v588 = vld [vmem:[%s248 + $0x510] sm:$0xff]
        %v589 = vld [vmem:[%s248 + $0x518] sm:$0xff]
        %v590 = vld [vmem:[%s248 + $0x520] sm:$0xff]
        %v591 = vld [vmem:[%s248 + $0x528] sm:$0xff]
        %v592 = vld [vmem:[%s248 + $0x530] sm:$0xff]
        %v593 = vld [vmem:[%s248 + $0x538] sm:$0xff]
        %v594 = vld [vmem:[%s248 + $0x540] sm:$0xff]
        %v595 = vld [vmem:[%s248 + $0x548] sm:$0xff]
        %v596 = vld [vmem:[%s248 + $0x550] sm:$0xff]
        %v597 = vld [vmem:[%s248 + $0x558] sm:$0xff]
        %v598 = vld [vmem:[%s248 + $0x560] sm:$0xff]
        %v599 = vld [vmem:[%s248 + $0x568] sm:$0xff]
        %v600 = vld [vmem:[%s248 + $0x570] sm:$0xff]
        %v601 = vld [vmem:[%s248 + $0x578] sm:$0xff]
        %v602 = vld [vmem:[%s248 + $0x580] sm:$0xff]
        %v603 = vld [vmem:[%s248 + $0x588] sm:$0xff]
        %v604 = vld [vmem:[%s248 + $0x590] sm:$0xff]
        %v605 = vld [vmem:[%s248 + $0x598] sm:$0xff]
        %v606 = vld [vmem:[%s248 + $0x5a0] sm:$0xff]
        %v607 = vld [vmem:[%s248 + $0x5a8] sm:$0xff]
        %v608 = vld [vmem:[%s248 + $0x5b0] sm:$0xff]
        %v609 = vld [vmem:[%s248 + $0x5b8] sm:$0xff]
        %v610 = vld [vmem:[%s248 + $0x5c0] sm:$0xff]
        %v611 = vld [vmem:[%s248 + $0x5c8] sm:$0xff]
        %v612 = vld [vmem:[%s248 + $0x5d0] sm:$0xff]
        %v613 = vld [vmem:[%s248 + $0x5d8] sm:$0xff]
        %v614 = vld [vmem:[%s248 + $0x5e0] sm:$0xff]
        %v615 = vld [vmem:[%s248 + $0x5e8] sm:$0xff]
        %v616 = vld [vmem:[%s248 + $0x5f0] sm:$0xff]
        %v617 = vld [vmem:[%s248 + $0x5f8] sm:$0xff]
        %v618 = vld [vmem:[%s248 + $0x600] sm:$0xff]
        %v619 = vld [vmem:[%s248 + $0x608] sm:$0xff]
        %v620 = vld [vmem:[%s248 + $0x610] sm:$0xff]
        %v621 = vld [vmem:[%s248 + $0x618] sm:$0xff]
        %v622 = vld [vmem:[%s248 + $0x620] sm:$0xff]
        %v623 = vld [vmem:[%s248 + $0x628] sm:$0xff]
        %v624 = vld [vmem:[%s248 + $0x630] sm:$0xff]
        %v625 = vld [vmem:[%s248 + $0x638] sm:$0xff]
        %v626 = vld [vmem:[%s248 + $0x640] sm:$0xff]
        %v627 = vld [vmem:[%s248 + $0x648] sm:$0xff]
        %v628 = vld [vmem:[%s248 + $0x650] sm:$0xff]
        %v629 = vld [vmem:[%s248 + $0x658] sm:$0xff]
        %v630 = vld [vmem:[%s248 + $0x660] sm:$0xff]
        %v631 = vld [vmem:[%s248 + $0x668] sm:$0xff]
        %v632 = vld [vmem:[%s248 + $0x670] sm:$0xff]
        %v633 = vld [vmem:[%s248 + $0x678] sm:$0xff]
        %v634 = vld [vmem:[%s248 + $0x680] sm:$0xff]
        %v635 = vld [vmem:[%s248 + $0x688] sm:$0xff]
        %v636 = vld [vmem:[%s248 + $0x690] sm:$0xff]
        %v637 = vld [vmem:[%s248 + $0x698] sm:$0xff]
        %v638 = vld [vmem:[%s248 + $0x6a0] sm:$0xff]
        %v639 = vld [vmem:[%s248 + $0x6a8] sm:$0xff]
        %v640 = vld [vmem:[%s248 + $0x6b0] sm:$0xff]
        %v641 = vld [vmem:[%s248 + $0x6b8] sm:$0xff]
        %v642 = vld [vmem:[%s248 + $0x6c0] sm:$0xff]
        %v643 = vld [vmem:[%s248 + $0x6c8] sm:$0xff]
        %v644 = vld [vmem:[%s248 + $0x6d0] sm:$0xff]
        %v645 = vld [vmem:[%s248 + $0x6d8] sm:$0xff]
        %v646 = vld [vmem:[%s248 + $0x6e0] sm:$0xff]
        %v647 = vld [vmem:[%s248 + $0x6e8] sm:$0xff]
        %v648 = vld [vmem:[%s248 + $0x6f0] sm:$0xff]
        %v649 = vld [vmem:[%s248 + $0x6f8] sm:$0xff]
        %v650 = vld [vmem:[%s248 + $0x700] sm:$0xf]
        %v651 = vld [vmem:[%s248 + $0x708] sm:$0xf]
        %v652 = vld [vmem:[%s2] sm:$0xff]
        %v653 = vld [vmem:[%s2 + $0x8] sm:$0xff]
        %v654 = vld [vmem:[%s2 + $0x10] sm:$0xff]
        %v655 = vld [vmem:[%s2 + $0x18] sm:$0xff]
        %v656 = vld [vmem:[%s2 + $0x20] sm:$0xff]
        %v657 = vld [vmem:[%s2 + $0x28] sm:$0xff]
        %v658 = vld [vmem:[%s2 + $0x30] sm:$0xff]
        %v659 = vld [vmem:[%s2 + $0x38] sm:$0xff]
        %v660 = vld [vmem:[%s2 + $0x40] sm:$0xff]
        %v661 = vld [vmem:[%s2 + $0x48] sm:$0xff]
        %v662 = vld [vmem:[%s2 + $0x50] sm:$0xff]
        %v663 = vld [vmem:[%s2 + $0x58] sm:$0xff]
        %v664 = vld [vmem:[%s2 + $0x60] sm:$0xff]
        %v665 = vld [vmem:[%s2 + $0x68] sm:$0xff]
        %v666 = vld [vmem:[%s2 + $0x70] sm:$0xff]
        %v667 = vld [vmem:[%s2 + $0x78] sm:$0xff]
        %669 = vset.pattern.permute.xlu0 0
        %670 = vperm.xlu0 %669, %v652
        %v671 = vpop.permute.xlu0 %670
        %674 = vset.pattern.permute.xlu0 0
        %675 = vperm.xlu0 %674, %v653
        %v676 = vpop.permute.xlu0 %675
        %679 = vset.pattern.permute.xlu0 0
        %680 = vperm.xlu0 %679, %v654
        %v681 = vpop.permute.xlu0 %680
        %684 = vset.pattern.permute.xlu0 0
        %685 = vperm.xlu0 %684, %v655
        %v686 = vpop.permute.xlu0 %685
        %689 = vset.pattern.permute.xlu0 0
        %690 = vperm.xlu0 %689, %v656
        %v691 = vpop.permute.xlu0 %690
        %694 = vset.pattern.permute.xlu0 0
        %695 = vperm.xlu0 %694, %v657
        %v696 = vpop.permute.xlu0 %695
        %699 = vset.pattern.permute.xlu0 0
        %700 = vperm.xlu0 %699, %v658
        %v701 = vpop.permute.xlu0 %700
        %704 = vset.pattern.permute.xlu0 0
        %705 = vperm.xlu0 %704, %v659
        %v706 = vpop.permute.xlu0 %705
        %709 = vset.pattern.permute.xlu0 0
        %710 = vperm.xlu0 %709, %v660
        %v711 = vpop.permute.xlu0 %710
        %714 = vset.pattern.permute.xlu0 0
        %715 = vperm.xlu0 %714, %v661
        %v716 = vpop.permute.xlu0 %715
        %719 = vset.pattern.permute.xlu0 0
        %720 = vperm.xlu0 %719, %v662
        %v721 = vpop.permute.xlu0 %720
        %724 = vset.pattern.permute.xlu0 0
        %725 = vperm.xlu0 %724, %v663
        %v726 = vpop.permute.xlu0 %725
        %729 = vset.pattern.permute.xlu0 0
        %730 = vperm.xlu0 %729, %v664
        %v731 = vpop.permute.xlu0 %730
        %734 = vset.pattern.permute.xlu0 0
        %735 = vperm.xlu0 %734, %v665
        %v736 = vpop.permute.xlu0 %735
        %739 = vset.pattern.permute.xlu0 0
        %740 = vperm.xlu0 %739, %v666
        %v741 = vpop.permute.xlu0 %740
        %744 = vset.pattern.permute.xlu0 0
        %745 = vperm.xlu0 %744, %v667
        %v746 = vpop.permute.xlu0 %745
        %vm748 = vcmask 31744
        %v750 = vsel %vm748, %v305, 0
        %v753 = vsel %vm748, %v313, 0
        %v756 = vsel %vm748, %v321, 0
        %v759 = vsel %vm748, %v329, 0
        %v762 = vsel %vm748, %v337, 0
        %v765 = vsel %vm748, %v345, 0
        %v768 = vsel %vm748, %v353, 0
        %v771 = vsel %vm748, %v361, 0
        %v774 = vsel %vm748, %v369, 0
        %v777 = vsel %vm748, %v377, 0
        %v780 = vsel %vm748, %v385, 0
        %v783 = vsel %vm748, %v393, 0
        %v786 = vsel %vm748, %v401, 0
        %v789 = vsel %vm748, %v409, 0
        %v792 = vsel %vm748, %v417, 0
        %v795 = vsel %vm748, %v425, 0
        %vm797 = vcmask 1043456
        %v799 = vsel %vm797, %v650, 0
        %v802 = vsel %vm797, %v651, 0
        %804 = vmatprep.subr.mxu0 %v427
        %805 = vmatpush1.msra.mxu0 %v426
        %806 = vmatprep.subr.mxu0 %v429
        %807 = vmatpush1.msra.mxu0 %v428
        %808 = vmatprep.subr.mxu0 %v431
        %809 = vmatpush1.msra.mxu0 %v430
        %810 = vmatprep.subr.mxu0 %v433
        %811 = vmatpush1.msra.mxu0 %v432
        %812 = vmatprep.subr.mxu0 %v435
        %813 = vmatpush1.msra.mxu0 %v434
        %814 = vmatprep.subr.mxu0 %v437
        %815 = vmatpush1.msra.mxu0 %v436
        %816 = vmatprep.subr.mxu0 %v439
        %817 = vmatpush1.msra.mxu0 %v438
        %818 = vmatprep.subr.mxu0 %v441
        %819 = vmatpush1.msra.mxu0 %v440
        %820 = vmatprep.subr.mxu0 %v443
        %821 = vmatpush1.msra.mxu0 %v442
        %822 = vmatprep.subr.mxu0 %v445
        %823 = vmatpush1.msra.mxu0 %v444
        %824 = vmatprep.subr.mxu0 %v447
        %825 = vmatpush1.msra.mxu0 %v446
        %826 = vmatprep.subr.mxu0 %v449
        %827 = vmatpush1.msra.mxu0 %v448
        %828 = vmatprep.subr.mxu0 %v451
        %829 = vmatpush1.msra.mxu0 %v450
        %830 = vmatprep.subr.mxu0 %v453
        %831 = vmatpush1.msra.mxu0 %v452
        %832 = vmatprep.subr.mxu0 %v455
        %833 = vmatpush1.msra.mxu0 %v454
        %834 = vmatprep.subr.mxu0 %v457
        %835 = vmatpush1.msra.mxu0 %v456
        %836 = vmatprep.subr.mxu0 %v459
        %837 = vmatpush1.msra.mxu0 %v458
        %838 = vmatprep.subr.mxu0 %v461
        %839 = vmatpush1.msra.mxu0 %v460
        %840 = vmatprep.subr.mxu0 %v463
        %841 = vmatpush1.msra.mxu0 %v462
        %842 = vmatprep.subr.mxu0 %v465
        %843 = vmatpush1.msra.mxu0 %v464
        %844 = vmatprep.subr.mxu0 %v467
        %845 = vmatpush1.msra.mxu0 %v466
        %846 = vmatprep.subr.mxu0 %v469
        %847 = vmatpush1.msra.mxu0 %v468
        %848 = vmatprep.subr.mxu0 %v471
        %849 = vmatpush1.msra.mxu0 %v470
        %850 = vmatprep.subr.mxu0 %v473
        %851 = vmatpush1.msra.mxu0 %v472
        %852 = vmatprep.subr.mxu0 %v475
        %853 = vmatpush1.msra.mxu0 %v474
        %854 = vmatprep.subr.mxu0 %v477
        %855 = vmatpush1.msra.mxu0 %v476
        %856 = vmatprep.subr.mxu0 %v479
        %857 = vmatpush1.msra.mxu0 %v478
        %858 = vmatprep.subr.mxu0 %v481
        %859 = vmatpush1.msra.mxu0 %v480
        %860 = vmatprep.subr.mxu0 %v483
        %861 = vmatpush1.msra.mxu0 %v482
        %862 = vmatprep.subr.mxu0 %v485
        %863 = vmatpush1.msra.mxu0 %v484
        %864 = vmatprep.subr.mxu0 %v487
        %865 = vmatpush1.msra.mxu0 %v486
        %866 = vmatprep.subr.mxu0 %v489
        %867 = vmatpush1.msra.mxu0 %v488
        %868 = vmatprep.mubr.f32.mxu0 %v299
        %869 = vmatmul.mubr.f32.gmra.mrb[0].mxu0 %v298
        %v870 = vpop.f32.mrb[0].mxu0
        %v871 = vadd.f32 %v671, %v870
        %v872 = vpop.f32.mrb[0].mxu0
        %v873 = vadd.f32 %v671, %v872
        %874 = vmatprep.mubr.f32.mxu0 %v307
        %875 = vmatmul.mubr.f32.gmra.mrb[0].mxu0 %v306
        %v876 = vpop.f32.mrb[0].mxu0
        %v877 = vadd.f32 %v676, %v876
        %v878 = vpop.f32.mrb[0].mxu0
        %v879 = vadd.f32 %v676, %v878
        %880 = vmatprep.mubr.f32.mxu0 %v315
        %881 = vmatmul.mubr.f32.gmra.mrb[0].mxu0 %v314
        %v882 = vpop.f32.mrb[0].mxu0
        %v883 = vadd.f32 %v681, %v882
        %v884 = vpop.f32.mrb[0].mxu0
        %v885 = vadd.f32 %v681, %v884
        %886 = vmatprep.mubr.f32.mxu0 %v323
        %887 = vmatmul.mubr.f32.gmra.mrb[0].mxu0 %v322
        %v888 = vpop.f32.mrb[0].mxu0
        %v889 = vadd.f32 %v686, %v888
        %v890 = vpop.f32.mrb[0].mxu0
        %v891 = vadd.f32 %v686, %v890
        %892 = vmatprep.mubr.f32.mxu0 %v331
        %893 = vmatmul.mubr.f32.gmra.mrb[0].mxu0 %v330
        %v894 = vpop.f32.mrb[0].mxu0
        %v895 = vadd.f32 %v691, %v894
        %v896 = vpop.f32.mrb[0].mxu0
        %v897 = vadd.f32 %v691, %v896
        %898 = vmatprep.mubr.f32.mxu0 %v339
        %899 = vmatmul.mubr.f32.gmra.mrb[0].mxu0 %v338
        %v900 = vpop.f32.mrb[0].mxu0
        %v901 = vadd.f32 %v696, %v900
        %v902 = vpop.f32.mrb[0].mxu0
        %v903 = vadd.f32 %v696, %v902
        %904 = vmatprep.mubr.f32.mxu0 %v347
        %905 = vmatmul.mubr.f32.gmra.mrb[0].mxu0 %v346
        %v906 = vpop.f32.mrb[0].mxu0
        %v907 = vadd.f32 %v701, %v906
        %v908 = vpop.f32.mrb[0].mxu0
        %v909 = vadd.f32 %v701, %v908
        %910 = vmatprep.mubr.f32.mxu0 %v355
        %911 = vmatmul.mubr.f32.gmra.mrb[0].mxu0 %v354
        %v912 = vpop.f32.mrb[0].mxu0
        %v913 = vadd.f32 %v706, %v912
        %v914 = vpop.f32.mrb[0].mxu0
        %v915 = vadd.f32 %v706, %v914
        %916 = vmatprep.mubr.f32.mxu0 %v363
        %917 = vmatmul.mubr.f32.gmra.mrb[0].mxu0 %v362
        %v918 = vpop.f32.mrb[0].mxu0
        %v919 = vadd.f32 %v711, %v918
        %v920 = vpop.f32.mrb[0].mxu0
        %v921 = vadd.f32 %v711, %v920
        %922 = vmatprep.mubr.f32.mxu0 %v371
        %923 = vmatmul.mubr.f32.gmra.mrb[0].mxu0 %v370
        %v924 = vpop.f32.mrb[0].mxu0
        %v925 = vadd.f32 %v716, %v924
        %v926 = vpop.f32.mrb[0].mxu0
        %v927 = vadd.f32 %v716, %v926
        %928 = vmatprep.mubr.f32.mxu0 %v379
        %929 = vmatmul.mubr.f32.gmra.mrb[0].mxu0 %v378
        %v930 = vpop.f32.mrb[0].mxu0
        %v931 = vadd.f32 %v721, %v930
        %v932 = vpop.f32.mrb[0].mxu0
        %v933 = vadd.f32 %v721, %v932
        %934 = vmatprep.mubr.f32.mxu0 %v387
        %935 = vmatmul.mubr.f32.gmra.mrb[0].mxu0 %v386
        %v936 = vpop.f32.mrb[0].mxu0
        %v937 = vadd.f32 %v726, %v936
        %v938 = vpop.f32.mrb[0].mxu0
        %v939 = vadd.f32 %v726, %v938
        %940 = vmatprep.mubr.f32.mxu0 %v395
        %941 = vmatmul.mubr.f32.gmra.mrb[0].mxu0 %v394
        %v942 = vpop.f32.mrb[0].mxu0
        %v943 = vadd.f32 %v731, %v942
        %v944 = vpop.f32.mrb[0].mxu0
        %v945 = vadd.f32 %v731, %v944
        %946 = vmatprep.mubr.f32.mxu0 %v403
        %947 = vmatmul.mubr.f32.gmra.mrb[0].mxu0 %v402
        %v948 = vpop.f32.mrb[0].mxu0
        %v949 = vadd.f32 %v736, %v948
        %v950 = vpop.f32.mrb[0].mxu0
        %v951 = vadd.f32 %v736, %v950
        %952 = vmatprep.mubr.f32.mxu0 %v411
        %953 = vmatmul.mubr.f32.gmra.mrb[0].mxu0 %v410
        %v954 = vpop.f32.mrb[0].mxu0
        %v955 = vadd.f32 %v741, %v954
        %v956 = vpop.f32.mrb[0].mxu0
        %v957 = vadd.f32 %v741, %v956
        %958 = vmatprep.mubr.f32.mxu0 %v419
        %959 = vmatmul.mubr.f32.gmra.mrb[0].mxu0 %v418
        %v960 = vpop.f32.mrb[0].mxu0
        %v961 = vadd.f32 %v746, %v960
        %v962 = vpop.f32.mrb[0].mxu0
        %v963 = vadd.f32 %v746, %v962
        %964 = vdwg.mxu0
        %965 = vmatprep.subr.mxu0 %v491
        %966 = vmatpush1.msra.mxu0 %v490
        %967 = vmatprep.subr.mxu0 %v493
        %968 = vmatpush1.msra.mxu0 %v492
        %969 = vmatprep.subr.mxu0 %v495
        %970 = vmatpush1.msra.mxu0 %v494
        %971 = vmatprep.subr.mxu0 %v497
        %972 = vmatpush1.msra.mxu0 %v496
        %973 = vmatprep.subr.mxu0 %v499
        %974 = vmatpush1.msra.mxu0 %v498
        %975 = vmatprep.subr.mxu0 %v501
        %976 = vmatpush1.msra.mxu0 %v500
        %977 = vmatprep.subr.mxu0 %v503
        %978 = vmatpush1.msra.mxu0 %v502
        %979 = vmatprep.subr.mxu0 %v505
        %980 = vmatpush1.msra.mxu0 %v504
        %981 = vmatprep.subr.mxu0 %v507
        %982 = vmatpush1.msra.mxu0 %v506
        %983 = vmatprep.subr.mxu0 %v509
        %984 = vmatpush1.msra.mxu0 %v508
        %985 = vmatprep.subr.mxu0 %v511
        %986 = vmatpush1.msra.mxu0 %v510
        %987 = vmatprep.subr.mxu0 %v513
        %988 = vmatpush1.msra.mxu0 %v512
        %989 = vmatprep.subr.mxu0 %v515
        %990 = vmatpush1.msra.mxu0 %v514
        %991 = vmatprep.subr.mxu0 %v517
        %992 = vmatpush1.msra.mxu0 %v516
        %993 = vmatprep.subr.mxu0 %v519
        %994 = vmatpush1.msra.mxu0 %v518
        %995 = vmatprep.subr.mxu0 %v521
        %996 = vmatpush1.msra.mxu0 %v520
        %997 = vmatprep.subr.mxu0 %v523
        %998 = vmatpush1.msra.mxu0 %v522
        %999 = vmatprep.subr.mxu0 %v525
        %1000 = vmatpush1.msra.mxu0 %v524
        %1001 = vmatprep.subr.mxu0 %v527
        %1002 = vmatpush1.msra.mxu0 %v526
        %1003 = vmatprep.subr.mxu0 %v529
        %1004 = vmatpush1.msra.mxu0 %v528
        %1005 = vmatprep.subr.mxu0 %v531
        %1006 = vmatpush1.msra.mxu0 %v530
        %1007 = vmatprep.subr.mxu0 %v533
        %1008 = vmatpush1.msra.mxu0 %v532
        %1009 = vmatprep.subr.mxu0 %v535
        %1010 = vmatpush1.msra.mxu0 %v534
        %1011 = vmatprep.subr.mxu0 %v537
        %1012 = vmatpush1.msra.mxu0 %v536
        %1013 = vmatprep.subr.mxu0 %v539
        %1014 = vmatpush1.msra.mxu0 %v538
        %1015 = vmatprep.subr.mxu0 %v541
        %1016 = vmatpush1.msra.mxu0 %v540
        %1017 = vmatprep.subr.mxu0 %v543
        %1018 = vmatpush1.msra.mxu0 %v542
        %1019 = vmatprep.subr.mxu0 %v545
        %1020 = vmatpush1.msra.mxu0 %v544
        %1021 = vmatprep.subr.mxu0 %v547
        %1022 = vmatpush1.msra.mxu0 %v546
        %1023 = vmatprep.subr.mxu0 %v549
        %1024 = vmatpush1.msra.mxu0 %v548
        %1025 = vmatprep.subr.mxu0 %v551
        %1026 = vmatpush1.msra.mxu0 %v550
        %1027 = vmatprep.subr.mxu0 %v553
        %1028 = vmatpush1.msra.mxu0 %v552
        %1029 = vmatprep.mubr.f32.mxu0 %v301
        %1030 = vmatmul.mubr.f32.gmra.mrb[0].mxu0 %v300
        %v1031 = vpop.f32.mrb[0].mxu0
        %v1032 = vadd.f32 %v871, %v1031
        %v1033 = vpop.f32.mrb[0].mxu0
        %v1034 = vadd.f32 %v873, %v1033
        %1035 = vmatprep.mubr.f32.mxu0 %v309
        %1036 = vmatmul.mubr.f32.gmra.mrb[0].mxu0 %v308
        %v1037 = vpop.f32.mrb[0].mxu0
        %v1038 = vadd.f32 %v877, %v1037
        %v1039 = vpop.f32.mrb[0].mxu0
        %v1040 = vadd.f32 %v879, %v1039
        %1041 = vmatprep.mubr.f32.mxu0 %v317
        %1042 = vmatmul.mubr.f32.gmra.mrb[0].mxu0 %v316
        %v1043 = vpop.f32.mrb[0].mxu0
        %v1044 = vadd.f32 %v883, %v1043
        %v1045 = vpop.f32.mrb[0].mxu0
        %v1046 = vadd.f32 %v885, %v1045
        %1047 = vmatprep.mubr.f32.mxu0 %v325
        %1048 = vmatmul.mubr.f32.gmra.mrb[0].mxu0 %v324
        %v1049 = vpop.f32.mrb[0].mxu0
        %v1050 = vadd.f32 %v889, %v1049
        %v1051 = vpop.f32.mrb[0].mxu0
        %v1052 = vadd.f32 %v891, %v1051
        %1053 = vmatprep.mubr.f32.mxu0 %v333
        %1054 = vmatmul.mubr.f32.gmra.mrb[0].mxu0 %v332
        %v1055 = vpop.f32.mrb[0].mxu0
        %v1056 = vadd.f32 %v895, %v1055
        %v1057 = vpop.f32.mrb[0].mxu0
        %v1058 = vadd.f32 %v897, %v1057
        %1059 = vmatprep.mubr.f32.mxu0 %v341
        %1060 = vmatmul.mubr.f32.gmra.mrb[0].mxu0 %v340
        %v1061 = vpop.f32.mrb[0].mxu0
        %v1062 = vadd.f32 %v901, %v1061
        %v1063 = vpop.f32.mrb[0].mxu0
        %v1064 = vadd.f32 %v903, %v1063
        %1065 = vmatprep.mubr.f32.mxu0 %v349
        %1066 = vmatmul.mubr.f32.gmra.mrb[0].mxu0 %v348
        %v1067 = vpop.f32.mrb[0].mxu0
        %v1068 = vadd.f32 %v907, %v1067
        %v1069 = vpop.f32.mrb[0].mxu0
        %v1070 = vadd.f32 %v909, %v1069
        %1071 = vmatprep.mubr.f32.mxu0 %v357
        %1072 = vmatmul.mubr.f32.gmra.mrb[0].mxu0 %v356
        %v1073 = vpop.f32.mrb[0].mxu0
        %v1074 = vadd.f32 %v913, %v1073
        %v1075 = vpop.f32.mrb[0].mxu0
        %v1076 = vadd.f32 %v915, %v1075
        %1077 = vmatprep.mubr.f32.mxu0 %v365
        %1078 = vmatmul.mubr.f32.gmra.mrb[0].mxu0 %v364
        %v1079 = vpop.f32.mrb[0].mxu0
        %v1080 = vadd.f32 %v919, %v1079
        %v1081 = vpop.f32.mrb[0].mxu0
        %v1082 = vadd.f32 %v921, %v1081
        %1083 = vmatprep.mubr.f32.mxu0 %v373
        %1084 = vmatmul.mubr.f32.gmra.mrb[0].mxu0 %v372
        %v1085 = vpop.f32.mrb[0].mxu0
        %v1086 = vadd.f32 %v925, %v1085
        %v1087 = vpop.f32.mrb[0].mxu0
        %v1088 = vadd.f32 %v927, %v1087
        %1089 = vmatprep.mubr.f32.mxu0 %v381
        %1090 = vmatmul.mubr.f32.gmra.mrb[0].mxu0 %v380
        %v1091 = vpop.f32.mrb[0].mxu0
        %v1092 = vadd.f32 %v931, %v1091
        %v1093 = vpop.f32.mrb[0].mxu0
        %v1094 = vadd.f32 %v933, %v1093
        %1095 = vmatprep.mubr.f32.mxu0 %v389
        %1096 = vmatmul.mubr.f32.gmra.mrb[0].mxu0 %v388
        %v1097 = vpop.f32.mrb[0].mxu0
        %v1098 = vadd.f32 %v937, %v1097
        %v1099 = vpop.f32.mrb[0].mxu0
        %v1100 = vadd.f32 %v939, %v1099
        %1101 = vmatprep.mubr.f32.mxu0 %v397
        %1102 = vmatmul.mubr.f32.gmra.mrb[0].mxu0 %v396
        %v1103 = vpop.f32.mrb[0].mxu0
        %v1104 = vadd.f32 %v943, %v1103
        %v1105 = vpop.f32.mrb[0].mxu0
        %v1106 = vadd.f32 %v945, %v1105
        %1107 = vmatprep.mubr.f32.mxu0 %v405
        %1108 = vmatmul.mubr.f32.gmra.mrb[0].mxu0 %v404
        %v1109 = vpop.f32.mrb[0].mxu0
        %v1110 = vadd.f32 %v949, %v1109
        %v1111 = vpop.f32.mrb[0].mxu0
        %v1112 = vadd.f32 %v951, %v1111
        %1113 = vmatprep.mubr.f32.mxu0 %v413
        %1114 = vmatmul.mubr.f32.gmra.mrb[0].mxu0 %v412
        %v1115 = vpop.f32.mrb[0].mxu0
        %v1116 = vadd.f32 %v955, %v1115
        %v1117 = vpop.f32.mrb[0].mxu0
        %v1118 = vadd.f32 %v957, %v1117
        %1119 = vmatprep.mubr.f32.mxu0 %v421
        %1120 = vmatmul.mubr.f32.gmra.mrb[0].mxu0 %v420
        %v1121 = vpop.f32.mrb[0].mxu0
        %v1122 = vadd.f32 %v961, %v1121
        %v1123 = vpop.f32.mrb[0].mxu0
        %v1124 = vadd.f32 %v963, %v1123
        %1125 = vdwg.mxu0
        %1126 = vmatprep.subr.mxu0 %v555
        %1127 = vmatpush1.msra.mxu0 %v554
        %1128 = vmatprep.subr.mxu0 %v557
        %1129 = vmatpush1.msra.mxu0 %v556
        %1130 = vmatprep.subr.mxu0 %v559
        %1131 = vmatpush1.msra.mxu0 %v558
        %1132 = vmatprep.subr.mxu0 %v561
        %1133 = vmatpush1.msra.mxu0 %v560
        %1134 = vmatprep.subr.mxu0 %v563
        %1135 = vmatpush1.msra.mxu0 %v562
        %1136 = vmatprep.subr.mxu0 %v565
        %1137 = vmatpush1.msra.mxu0 %v564
        %1138 = vmatprep.subr.mxu0 %v567
        %1139 = vmatpush1.msra.mxu0 %v566
        %1140 = vmatprep.subr.mxu0 %v569
        %1141 = vmatpush1.msra.mxu0 %v568
        %1142 = vmatprep.subr.mxu0 %v571
        %1143 = vmatpush1.msra.mxu0 %v570
        %1144 = vmatprep.subr.mxu0 %v573
        %1145 = vmatpush1.msra.mxu0 %v572
        %1146 = vmatprep.subr.mxu0 %v575
        %1147 = vmatpush1.msra.mxu0 %v574
        %1148 = vmatprep.subr.mxu0 %v577
        %1149 = vmatpush1.msra.mxu0 %v576
        %1150 = vmatprep.subr.mxu0 %v579
        %1151 = vmatpush1.msra.mxu0 %v578
        %1152 = vmatprep.subr.mxu0 %v581
        %1153 = vmatpush1.msra.mxu0 %v580
        %1154 = vmatprep.subr.mxu0 %v583
        %1155 = vmatpush1.msra.mxu0 %v582
        %1156 = vmatprep.subr.mxu0 %v585
        %1157 = vmatpush1.msra.mxu0 %v584
        %1158 = vmatprep.subr.mxu0 %v587
        %1159 = vmatpush1.msra.mxu0 %v586
        %1160 = vmatprep.subr.mxu0 %v589
        %1161 = vmatpush1.msra.mxu0 %v588
        %1162 = vmatprep.subr.mxu0 %v591
        %1163 = vmatpush1.msra.mxu0 %v590
        %1164 = vmatprep.subr.mxu0 %v593
        %1165 = vmatpush1.msra.mxu0 %v592
        %1166 = vmatprep.subr.mxu0 %v595
        %1167 = vmatpush1.msra.mxu0 %v594
        %1168 = vmatprep.subr.mxu0 %v597
        %1169 = vmatpush1.msra.mxu0 %v596
        %1170 = vmatprep.subr.mxu0 %v599
        %1171 = vmatpush1.msra.mxu0 %v598
        %1172 = vmatprep.subr.mxu0 %v601
        %1173 = vmatpush1.msra.mxu0 %v600
        %1174 = vmatprep.subr.mxu0 %v603
        %1175 = vmatpush1.msra.mxu0 %v602
        %1176 = vmatprep.subr.mxu0 %v605
        %1177 = vmatpush1.msra.mxu0 %v604
        %1178 = vmatprep.subr.mxu0 %v607
        %1179 = vmatpush1.msra.mxu0 %v606
        %1180 = vmatprep.subr.mxu0 %v609
        %1181 = vmatpush1.msra.mxu0 %v608
        %1182 = vmatprep.subr.mxu0 %v611
        %1183 = vmatpush1.msra.mxu0 %v610
        %1184 = vmatprep.subr.mxu0 %v613
        %1185 = vmatpush1.msra.mxu0 %v612
        %1186 = vmatprep.subr.mxu0 %v615
        %1187 = vmatpush1.msra.mxu0 %v614
        %1188 = vmatprep.subr.mxu0 %v617
        %1189 = vmatpush1.msra.mxu0 %v616
        %1190 = vmatprep.mubr.f32.mxu0 %v303
        %1191 = vmatmul.mubr.f32.gmra.mrb[0].mxu0 %v302
        %v1192 = vpop.f32.mrb[0].mxu0
        %v1193 = vadd.f32 %v1032, %v1192
        %v1194 = vpop.f32.mrb[0].mxu0
        %v1195 = vadd.f32 %v1034, %v1194
        %1196 = vmatprep.mubr.f32.mxu0 %v311
        %1197 = vmatmul.mubr.f32.gmra.mrb[0].mxu0 %v310
        %v1198 = vpop.f32.mrb[0].mxu0
        %v1199 = vadd.f32 %v1038, %v1198
        %v1200 = vpop.f32.mrb[0].mxu0
        %v1201 = vadd.f32 %v1040, %v1200
        %1202 = vmatprep.mubr.f32.mxu0 %v319
        %1203 = vmatmul.mubr.f32.gmra.mrb[0].mxu0 %v318
        %v1204 = vpop.f32.mrb[0].mxu0
        %v1205 = vadd.f32 %v1044, %v1204
        %v1206 = vpop.f32.mrb[0].mxu0
        %v1207 = vadd.f32 %v1046, %v1206
        %1208 = vmatprep.mubr.f32.mxu0 %v327
        %1209 = vmatmul.mubr.f32.gmra.mrb[0].mxu0 %v326
        %v1210 = vpop.f32.mrb[0].mxu0
        %v1211 = vadd.f32 %v1050, %v1210
        %v1212 = vpop.f32.mrb[0].mxu0
        %v1213 = vadd.f32 %v1052, %v1212
        %1214 = vmatprep.mubr.f32.mxu0 %v335
        %1215 = vmatmul.mubr.f32.gmra.mrb[0].mxu0 %v334
        %v1216 = vpop.f32.mrb[0].mxu0
        %v1217 = vadd.f32 %v1056, %v1216
        %v1218 = vpop.f32.mrb[0].mxu0
        %v1219 = vadd.f32 %v1058, %v1218
        %1220 = vmatprep.mubr.f32.mxu0 %v343
        %1221 = vmatmul.mubr.f32.gmra.mrb[0].mxu0 %v342
        %v1222 = vpop.f32.mrb[0].mxu0
        %v1223 = vadd.f32 %v1062, %v1222
        %v1224 = vpop.f32.mrb[0].mxu0
        %v1225 = vadd.f32 %v1064, %v1224
        %1226 = vmatprep.mubr.f32.mxu0 %v351
        %1227 = vmatmul.mubr.f32.gmra.mrb[0].mxu0 %v350
        %v1228 = vpop.f32.mrb[0].mxu0
        %v1229 = vadd.f32 %v1068, %v1228
        %v1230 = vpop.f32.mrb[0].mxu0
        %v1231 = vadd.f32 %v1070, %v1230
        %1232 = vmatprep.mubr.f32.mxu0 %v359
        %1233 = vmatmul.mubr.f32.gmra.mrb[0].mxu0 %v358
        %v1234 = vpop.f32.mrb[0].mxu0
        %v1235 = vadd.f32 %v1074, %v1234
        %v1236 = vpop.f32.mrb[0].mxu0
        %v1237 = vadd.f32 %v1076, %v1236
        %1238 = vmatprep.mubr.f32.mxu0 %v367
        %1239 = vmatmul.mubr.f32.gmra.mrb[0].mxu0 %v366
        %v1240 = vpop.f32.mrb[0].mxu0
        %v1241 = vadd.f32 %v1080, %v1240
        %v1242 = vpop.f32.mrb[0].mxu0
        %v1243 = vadd.f32 %v1082, %v1242
        %1244 = vmatprep.mubr.f32.mxu0 %v375
        %1245 = vmatmul.mubr.f32.gmra.mrb[0].mxu0 %v374
        %v1246 = vpop.f32.mrb[0].mxu0
        %v1247 = vadd.f32 %v1086, %v1246
        %v1248 = vpop.f32.mrb[0].mxu0
        %v1249 = vadd.f32 %v1088, %v1248
        %1250 = vmatprep.mubr.f32.mxu0 %v383
        %1251 = vmatmul.mubr.f32.gmra.mrb[0].mxu0 %v382
        %v1252 = vpop.f32.mrb[0].mxu0
        %v1253 = vadd.f32 %v1092, %v1252
        %v1254 = vpop.f32.mrb[0].mxu0
        %v1255 = vadd.f32 %v1094, %v1254
        %1256 = vmatprep.mubr.f32.mxu0 %v391
        %1257 = vmatmul.mubr.f32.gmra.mrb[0].mxu0 %v390
        %v1258 = vpop.f32.mrb[0].mxu0
        %v1259 = vadd.f32 %v1098, %v1258
        %v1260 = vpop.f32.mrb[0].mxu0
        %v1261 = vadd.f32 %v1100, %v1260
        %1262 = vmatprep.mubr.f32.mxu0 %v399
        %1263 = vmatmul.mubr.f32.gmra.mrb[0].mxu0 %v398
        %v1264 = vpop.f32.mrb[0].mxu0
        %v1265 = vadd.f32 %v1104, %v1264
        %v1266 = vpop.f32.mrb[0].mxu0
        %v1267 = vadd.f32 %v1106, %v1266
        %1268 = vmatprep.mubr.f32.mxu0 %v407
        %1269 = vmatmul.mubr.f32.gmra.mrb[0].mxu0 %v406
        %v1270 = vpop.f32.mrb[0].mxu0
        %v1271 = vadd.f32 %v1110, %v1270
        %v1272 = vpop.f32.mrb[0].mxu0
        %v1273 = vadd.f32 %v1112, %v1272
        %1274 = vmatprep.mubr.f32.mxu0 %v415
        %1275 = vmatmul.mubr.f32.gmra.mrb[0].mxu0 %v414
        %v1276 = vpop.f32.mrb[0].mxu0
        %v1277 = vadd.f32 %v1116, %v1276
        %v1278 = vpop.f32.mrb[0].mxu0
        %v1279 = vadd.f32 %v1118, %v1278
        %1280 = vmatprep.mubr.f32.mxu0 %v423
        %1281 = vmatmul.mubr.f32.gmra.mrb[0].mxu0 %v422
        %v1282 = vpop.f32.mrb[0].mxu0
        %v1283 = vadd.f32 %v1122, %v1282
        %v1284 = vpop.f32.mrb[0].mxu0
        %v1285 = vadd.f32 %v1124, %v1284
        %1286 = vdwg.mxu0
        %1287 = vmatprep.subr.mxu0 %v619
        %1288 = vmatpush1.msra.mxu0 %v618
        %1289 = vmatprep.subr.mxu0 %v621
        %1290 = vmatpush1.msra.mxu0 %v620
        %1291 = vmatprep.subr.mxu0 %v623
        %1292 = vmatpush1.msra.mxu0 %v622
        %1293 = vmatprep.subr.mxu0 %v625
        %1294 = vmatpush1.msra.mxu0 %v624
        %1295 = vmatprep.subr.mxu0 %v627
        %1296 = vmatpush1.msra.mxu0 %v626
        %1297 = vmatprep.subr.mxu0 %v629
        %1298 = vmatpush1.msra.mxu0 %v628
        %1299 = vmatprep.subr.mxu0 %v631
        %1300 = vmatpush1.msra.mxu0 %v630
        %1301 = vmatprep.subr.mxu0 %v633
        %1302 = vmatpush1.msra.mxu0 %v632
        %1303 = vmatprep.subr.mxu0 %v635
        %1304 = vmatpush1.msra.mxu0 %v634
        %1305 = vmatprep.subr.mxu0 %v637
        %1306 = vmatpush1.msra.mxu0 %v636
        %1307 = vmatprep.subr.mxu0 %v639
        %1308 = vmatpush1.msra.mxu0 %v638
        %1309 = vmatprep.subr.mxu0 %v641
        %1310 = vmatpush1.msra.mxu0 %v640
        %1311 = vmatprep.subr.mxu0 %v643
        %1312 = vmatpush1.msra.mxu0 %v642
        %1313 = vmatprep.subr.mxu0 %v645
        %1314 = vmatpush1.msra.mxu0 %v644
        %1315 = vmatprep.subr.mxu0 %v647
        %1316 = vmatpush1.msra.mxu0 %v646
        %1317 = vmatprep.subr.mxu0 %v649
        %1318 = vmatpush1.msra.mxu0 %v648
        %1319 = vmatprep.subr.mxu0 %v802
        %1320 = vmatpush1.msra.mxu0 %v799
        %1321 = vmatprep.subr.mxu0 0.0
        %1322 = vmatpush1.msra.mxu0 0.0
        %1323 = vmatprep.subr.mxu0 0.0
        %1324 = vmatpush1.msra.mxu0 0.0
        %1325 = vmatprep.subr.mxu0 0.0
        %1326 = vmatpush1.msra.mxu0 0.0
        %1327 = vmatprep.subr.mxu0 0.0
        %1328 = vmatpush1.msra.mxu0 0.0
        %1329 = vmatprep.subr.mxu0 0.0
        %1330 = vmatpush1.msra.mxu0 0.0
        %1331 = vmatprep.subr.mxu0 0.0
        %1332 = vmatpush1.msra.mxu0 0.0
        %1333 = vmatprep.subr.mxu0 0.0
        %1334 = vmatpush1.msra.mxu0 0.0
        %1335 = vmatprep.subr.mxu0 0.0
        %1336 = vmatpush1.msra.mxu0 0.0
        %1337 = vmatprep.subr.mxu0 0.0
        %1338 = vmatpush1.msra.mxu0 0.0
        %1339 = vmatprep.subr.mxu0 0.0
        %1340 = vmatpush1.msra.mxu0 0.0
        %1341 = vmatprep.subr.mxu0 0.0
        %1342 = vmatpush1.msra.mxu0 0.0
        %1343 = vmatprep.subr.mxu0 0.0
        %1344 = vmatpush1.msra.mxu0 0.0
        %1345 = vmatprep.subr.mxu0 0.0
        %1346 = vmatpush1.msra.mxu0 0.0
        %1347 = vmatprep.subr.mxu0 0.0
        %1348 = vmatpush1.msra.mxu0 0.0
        %1349 = vmatprep.subr.mxu0 0.0
        %1350 = vmatpush1.msra.mxu0 0.0
        %1351 = vmatprep.mubr.f32.mxu0 %v750
        %1352 = vmatmul.mubr.f32.gmra.mrb[0].mxu0 %v304
        %v1353 = vpop.f32.mrb[0].mxu0
        %v1354 = vadd.f32 %v1193, %v1353
        %v1355 = vpop.f32.mrb[0].mxu0
        %v1356 = vadd.f32 %v1195, %v1355
        %1357 = vmatprep.mubr.f32.mxu0 %v753
        %1358 = vmatmul.mubr.f32.gmra.mrb[0].mxu0 %v312
        %v1359 = vpop.f32.mrb[0].mxu0
        %v1360 = vadd.f32 %v1199, %v1359
        %v1361 = vpop.f32.mrb[0].mxu0
        %v1362 = vadd.f32 %v1201, %v1361
        %1363 = vmatprep.mubr.f32.mxu0 %v756
        %1364 = vmatmul.mubr.f32.gmra.mrb[0].mxu0 %v320
        %v1365 = vpop.f32.mrb[0].mxu0
        %v1366 = vadd.f32 %v1205, %v1365
        %v1367 = vpop.f32.mrb[0].mxu0
        %v1368 = vadd.f32 %v1207, %v1367
        %1369 = vmatprep.mubr.f32.mxu0 %v759
        %1370 = vmatmul.mubr.f32.gmra.mrb[0].mxu0 %v328
        %v1371 = vpop.f32.mrb[0].mxu0
        %v1372 = vadd.f32 %v1211, %v1371
        %v1373 = vpop.f32.mrb[0].mxu0
        %v1374 = vadd.f32 %v1213, %v1373
        %1375 = vmatprep.mubr.f32.mxu0 %v762
        %1376 = vmatmul.mubr.f32.gmra.mrb[0].mxu0 %v336
        %v1377 = vpop.f32.mrb[0].mxu0
        %v1378 = vadd.f32 %v1217, %v1377
        %v1379 = vpop.f32.mrb[0].mxu0
        %v1380 = vadd.f32 %v1219, %v1379
        %1381 = vmatprep.mubr.f32.mxu0 %v765
        %1382 = vmatmul.mubr.f32.gmra.mrb[0].mxu0 %v344
        %v1383 = vpop.f32.mrb[0].mxu0
        %v1384 = vadd.f32 %v1223, %v1383
        %v1385 = vpop.f32.mrb[0].mxu0
        %v1386 = vadd.f32 %v1225, %v1385
        %1387 = vmatprep.mubr.f32.mxu0 %v768
        %1388 = vmatmul.mubr.f32.gmra.mrb[0].mxu0 %v352
        %v1389 = vpop.f32.mrb[0].mxu0
        %v1390 = vadd.f32 %v1229, %v1389
        %v1391 = vpop.f32.mrb[0].mxu0
        %v1392 = vadd.f32 %v1231, %v1391
        %1393 = vmatprep.mubr.f32.mxu0 %v771
        %1394 = vmatmul.mubr.f32.gmra.mrb[0].mxu0 %v360
        %v1395 = vpop.f32.mrb[0].mxu0
        %v1396 = vadd.f32 %v1235, %v1395
        %v1397 = vpop.f32.mrb[0].mxu0
        %v1398 = vadd.f32 %v1237, %v1397
        %1399 = vmatprep.mubr.f32.mxu0 %v774
        %1400 = vmatmul.mubr.f32.gmra.mrb[0].mxu0 %v368
        %v1401 = vpop.f32.mrb[0].mxu0
        %v1402 = vadd.f32 %v1241, %v1401
        %v1403 = vpop.f32.mrb[0].mxu0
        %v1404 = vadd.f32 %v1243, %v1403
        %1405 = vmatprep.mubr.f32.mxu0 %v777
        %1406 = vmatmul.mubr.f32.gmra.mrb[0].mxu0 %v376
        %v1407 = vpop.f32.mrb[0].mxu0
        %v1408 = vadd.f32 %v1247, %v1407
        %v1409 = vpop.f32.mrb[0].mxu0
        %v1410 = vadd.f32 %v1249, %v1409
        %1411 = vmatprep.mubr.f32.mxu0 %v780
        %1412 = vmatmul.mubr.f32.gmra.mrb[0].mxu0 %v384
        %v1413 = vpop.f32.mrb[0].mxu0
        %v1414 = vadd.f32 %v1253, %v1413
        %v1415 = vpop.f32.mrb[0].mxu0
        %v1416 = vadd.f32 %v1255, %v1415
        %1417 = vmatprep.mubr.f32.mxu0 %v783
        %1418 = vmatmul.mubr.f32.gmra.mrb[0].mxu0 %v392
        %v1419 = vpop.f32.mrb[0].mxu0
        %v1420 = vadd.f32 %v1259, %v1419
        %v1421 = vpop.f32.mrb[0].mxu0
        %v1422 = vadd.f32 %v1261, %v1421
        %1423 = vmatprep.mubr.f32.mxu0 %v786
        %1424 = vmatmul.mubr.f32.gmra.mrb[0].mxu0 %v400
        %v1425 = vpop.f32.mrb[0].mxu0
        %v1426 = vadd.f32 %v1265, %v1425
        %v1427 = vpop.f32.mrb[0].mxu0
        %v1428 = vadd.f32 %v1267, %v1427
        %1429 = vmatprep.mubr.f32.mxu0 %v789
        %1430 = vmatmul.mubr.f32.gmra.mrb[0].mxu0 %v408
        %v1431 = vpop.f32.mrb[0].mxu0
        %v1432 = vadd.f32 %v1271, %v1431
        %v1433 = vpop.f32.mrb[0].mxu0
        %v1434 = vadd.f32 %v1273, %v1433
        %1435 = vmatprep.mubr.f32.mxu0 %v792
        %1436 = vmatmul.mubr.f32.gmra.mrb[0].mxu0 %v416
        %v1437 = vpop.f32.mrb[0].mxu0
        %v1438 = vadd.f32 %v1277, %v1437
        %v1439 = vpop.f32.mrb[0].mxu0
        %v1440 = vadd.f32 %v1279, %v1439
        %1441 = vmatprep.mubr.f32.mxu0 %v795
        %1442 = vmatmul.mubr.f32.gmra.mrb[0].mxu0 %v424
        %v1443 = vpop.f32.mrb[0].mxu0
        %v1444 = vadd.f32 %v1283, %v1443
        %v1445 = vpop.f32.mrb[0].mxu0
        %v1446 = vadd.f32 %v1285, %v1445
        %1447 = vdwg.mxu0
        %v1448 = vld [vmem:[%s257] sm:$0xff]
        %v1449 = vld [vmem:[%s257 + $0x8] sm:$0xff]
        %v1450 = vld [vmem:[%s257 + $0x10] sm:$0xff]
        %v1451 = vld [vmem:[%s257 + $0x18] sm:$0xff]
        %v1452 = vld [vmem:[%s257 + $0x20] sm:$0xff]
        %v1453 = vld [vmem:[%s257 + $0x28] sm:$0xff]
        %v1454 = vld [vmem:[%s257 + $0x30] sm:$0xff]
        %v1455 = vld [vmem:[%s257 + $0x38] sm:$0xff]
        %v1456 = vxor.u32 %v1402, 2147483648
        %v1457 = vxor.u32 %v1404, 2147483648
        %v1458 = vxor.u32 %v1408, 2147483648
        %v1459 = vxor.u32 %v1410, 2147483648
        %v1460 = vxor.u32 %v1414, 2147483648
        %v1461 = vxor.u32 %v1416, 2147483648
        %v1462 = vxor.u32 %v1420, 2147483648
        %v1463 = vxor.u32 %v1422, 2147483648
        %v1464 = vmul.f32 %v1456, 1.442695
        %v1465 = vpow.pop %v1464
        %v1466 = vmul.f32 %v1457, 1.442695
        %v1467 = vpow.pop %v1466
        %v1468 = vmul.f32 %v1458, 1.442695
        %v1469 = vpow.pop %v1468
        %v1470 = vmul.f32 %v1459, 1.442695
        %v1471 = vpow.pop %v1470
        %v1472 = vmul.f32 %v1460, 1.442695
        %v1473 = vpow.pop %v1472
        %v1474 = vmul.f32 %v1461, 1.442695
        %v1475 = vpow.pop %v1474
        %v1476 = vmul.f32 %v1462, 1.442695
        %v1477 = vpow.pop %v1476
        %v1478 = vmul.f32 %v1463, 1.442695
        %v1479 = vpow.pop %v1478
        %v1480 = vadd.f32 %v1465, 1.0
        %v1481 = vadd.f32 %v1467, 1.0
        %v1482 = vadd.f32 %v1469, 1.0
        %v1483 = vadd.f32 %v1471, 1.0
        %v1484 = vadd.f32 %v1473, 1.0
        %v1485 = vadd.f32 %v1475, 1.0
        %v1486 = vadd.f32 %v1477, 1.0
        %v1487 = vadd.f32 %v1479, 1.0
        %v1488 = vrcp.pop %v1480
        %v1489 = vmul.f32 1.0, %v1488
        %v1490 = vrcp.pop %v1481
        %v1491 = vmul.f32 1.0, %v1490
        %v1492 = vrcp.pop %v1482
        %v1493 = vmul.f32 1.0, %v1492
        %v1494 = vrcp.pop %v1483
        %v1495 = vmul.f32 1.0, %v1494
        %v1496 = vrcp.pop %v1484
        %v1497 = vmul.f32 1.0, %v1496
        %v1498 = vrcp.pop %v1485
        %v1499 = vmul.f32 1.0, %v1498
        %v1500 = vrcp.pop %v1486
        %v1501 = vmul.f32 1.0, %v1500
        %v1502 = vrcp.pop %v1487
        %v1503 = vmul.f32 1.0, %v1502
        %v1504 = vmul.f32 %v1448, %v1489
        %v1505 = vmul.f32 %v1449, %v1491
        %v1506 = vmul.f32 %v1450, %v1493
        %v1507 = vmul.f32 %v1451, %v1495
        %v1508 = vmul.f32 %v1452, %v1497
        %v1509 = vmul.f32 %v1453, %v1499
        %v1510 = vmul.f32 %v1454, %v1501
        %v1511 = vmul.f32 %v1455, %v1503
        %v1512 = vxor.u32 %v1354, 2147483648
        %v1513 = vxor.u32 %v1356, 2147483648
        %v1514 = vxor.u32 %v1360, 2147483648
        %v1515 = vxor.u32 %v1362, 2147483648
        %v1516 = vxor.u32 %v1366, 2147483648
        %v1517 = vxor.u32 %v1368, 2147483648
        %v1518 = vxor.u32 %v1372, 2147483648
        %v1519 = vxor.u32 %v1374, 2147483648
        %v1520 = vmul.f32 %v1512, 1.442695
        %v1521 = vpow.pop %v1520
        %v1522 = vmul.f32 %v1513, 1.442695
        %v1523 = vpow.pop %v1522
        %v1524 = vmul.f32 %v1514, 1.442695
        %v1525 = vpow.pop %v1524
        %v1526 = vmul.f32 %v1515, 1.442695
        %v1527 = vpow.pop %v1526
        %v1528 = vmul.f32 %v1516, 1.442695
        %v1529 = vpow.pop %v1528
        %v1530 = vmul.f32 %v1517, 1.442695
        %v1531 = vpow.pop %v1530
        %v1532 = vmul.f32 %v1518, 1.442695
        %v1533 = vpow.pop %v1532
        %v1534 = vmul.f32 %v1519, 1.442695
        %v1535 = vpow.pop %v1534
        %v1536 = vadd.f32 %v1521, 1.0
        %v1537 = vadd.f32 %v1523, 1.0
        %v1538 = vadd.f32 %v1525, 1.0
        %v1539 = vadd.f32 %v1527, 1.0
        %v1540 = vadd.f32 %v1529, 1.0
        %v1541 = vadd.f32 %v1531, 1.0
        %v1542 = vadd.f32 %v1533, 1.0
        %v1543 = vadd.f32 %v1535, 1.0
        %v1544 = vrcp.pop %v1536
        %v1545 = vmul.f32 1.0, %v1544
        %v1546 = vrcp.pop %v1537
        %v1547 = vmul.f32 1.0, %v1546
        %v1548 = vrcp.pop %v1538
        %v1549 = vmul.f32 1.0, %v1548
        %v1550 = vrcp.pop %v1539
        %v1551 = vmul.f32 1.0, %v1550
        %v1552 = vrcp.pop %v1540
        %v1553 = vmul.f32 1.0, %v1552
        %v1554 = vrcp.pop %v1541
        %v1555 = vmul.f32 1.0, %v1554
        %v1556 = vrcp.pop %v1542
        %v1557 = vmul.f32 1.0, %v1556
        %v1558 = vrcp.pop %v1543
        %v1559 = vmul.f32 1.0, %v1558
        %v1560 = vtanh.pop %v1378
        %v1561 = vtanh.pop %v1380
        %v1562 = vtanh.pop %v1384
        %v1563 = vtanh.pop %v1386
        %v1564 = vtanh.pop %v1390
        %v1565 = vtanh.pop %v1392
        %v1566 = vtanh.pop %v1396
        %v1567 = vtanh.pop %v1398
        %v1568 = vmul.f32 %v1545, %v1560
        %v1569 = vmul.f32 %v1547, %v1561
        %v1570 = vmul.f32 %v1549, %v1562
        %v1571 = vmul.f32 %v1551, %v1563
        %v1572 = vmul.f32 %v1553, %v1564
        %v1573 = vmul.f32 %v1555, %v1565
        %v1574 = vmul.f32 %v1557, %v1566
        %v1575 = vmul.f32 %v1559, %v1567
        %v1576 = vadd.f32 %v1504, %v1568
        %v1577 = vadd.f32 %v1505, %v1569
        %v1578 = vadd.f32 %v1506, %v1570
        %v1579 = vadd.f32 %v1507, %v1571
        %v1580 = vadd.f32 %v1508, %v1572
        %v1581 = vadd.f32 %v1509, %v1573
        %v1582 = vadd.f32 %v1510, %v1574
        %v1583 = vadd.f32 %v1511, %v1575
        %v1584 = vtanh.pop %v1576
        %v1585 = vtanh.pop %v1577
        %v1586 = vtanh.pop %v1578
        %v1587 = vtanh.pop %v1579
        %v1588 = vtanh.pop %v1580
        %v1589 = vtanh.pop %v1581
        %v1590 = vtanh.pop %v1582
        %v1591 = vtanh.pop %v1583
        %v1592 = vxor.u32 %v1426, 2147483648
        %v1593 = vxor.u32 %v1428, 2147483648
        %v1594 = vxor.u32 %v1432, 2147483648
        %v1595 = vxor.u32 %v1434, 2147483648
        %v1596 = vxor.u32 %v1438, 2147483648
        %v1597 = vxor.u32 %v1440, 2147483648
        %v1598 = vxor.u32 %v1444, 2147483648
        %v1599 = vxor.u32 %v1446, 2147483648
        %v1600 = vmul.f32 %v1592, 1.442695
        %v1601 = vpow.pop %v1600
        %v1602 = vmul.f32 %v1593, 1.442695
        %v1603 = vpow.pop %v1602
        %v1604 = vmul.f32 %v1594, 1.442695
        %v1605 = vpow.pop %v1604
        %v1606 = vmul.f32 %v1595, 1.442695
        %v1607 = vpow.pop %v1606
        %v1608 = vmul.f32 %v1596, 1.442695
        %v1609 = vpow.pop %v1608
        %v1610 = vmul.f32 %v1597, 1.442695
        %v1611 = vpow.pop %v1610
        %v1612 = vmul.f32 %v1598, 1.442695
        %v1613 = vpow.pop %v1612
        %v1614 = vmul.f32 %v1599, 1.442695
        %v1615 = vpow.pop %v1614
        %v1616 = vadd.f32 %v1601, 1.0
        %v1617 = vadd.f32 %v1603, 1.0
        %v1618 = vadd.f32 %v1605, 1.0
        %v1619 = vadd.f32 %v1607, 1.0
        %v1620 = vadd.f32 %v1609, 1.0
        %v1621 = vadd.f32 %v1611, 1.0
        %v1622 = vadd.f32 %v1613, 1.0
        %v1623 = vadd.f32 %v1615, 1.0
        %v1624 = vrcp.pop %v1616
        %v1625 = vmul.f32 1.0, %v1624
        %v1626 = vrcp.pop %v1617
        %v1627 = vmul.f32 1.0, %v1626
        %v1628 = vrcp.pop %v1618
        %v1629 = vmul.f32 1.0, %v1628
        %v1630 = vrcp.pop %v1619
        %v1631 = vmul.f32 1.0, %v1630
        %v1632 = vrcp.pop %v1620
        %v1633 = vmul.f32 1.0, %v1632
        %v1634 = vrcp.pop %v1621
        %v1635 = vmul.f32 1.0, %v1634
        %v1636 = vrcp.pop %v1622
        %v1637 = vmul.f32 1.0, %v1636
        %v1638 = vrcp.pop %v1623
        %v1639 = vmul.f32 1.0, %v1638
        %v1640 = vmul.f32 %v1584, %v1625
        %v1641 = vmul.f32 %v1585, %v1627
        %v1642 = vmul.f32 %v1586, %v1629
        %v1643 = vmul.f32 %v1587, %v1631
        %v1644 = vmul.f32 %v1588, %v1633
        %v1645 = vmul.f32 %v1589, %v1635
        %v1646 = vmul.f32 %v1590, %v1637
        %v1647 = vmul.f32 %v1591, %v1639
        %1648 = vst [vmem:[%s293] sm:$0xff] %v1576
        %1649 = vst [vmem:[%s293 + $0x8] sm:$0xff] %v1577
        %1650 = vst [vmem:[%s293 + $0x10] sm:$0xff] %v1578
        %1651 = vst [vmem:[%s293 + $0x18] sm:$0xff] %v1579
        %1652 = vst [vmem:[%s293 + $0x20] sm:$0xff] %v1580
        %1653 = vst [vmem:[%s293 + $0x28] sm:$0xff] %v1581
        %1654 = vst [vmem:[%s293 + $0x30] sm:$0xff] %v1582
        %1655 = vst [vmem:[%s293 + $0x38] sm:$0xff] %v1583
        %1656 = vst [vmem:[%s286] sm:$0xff] %v1640
        %1657 = vst [vmem:[%s286 + $0x8] sm:$0xff] %v1641
        %1658 = vst [vmem:[%s286 + $0x10] sm:$0xff] %v1642
        %1659 = vst [vmem:[%s286 + $0x18] sm:$0xff] %v1643
        %1660 = vst [vmem:[%s286 + $0x20] sm:$0xff] %v1644
        %1661 = vst [vmem:[%s286 + $0x28] sm:$0xff] %v1645
        %1662 = vst [vmem:[%s286 + $0x30] sm:$0xff] %v1646
        %1663 = vst [vmem:[%s286 + $0x38] sm:$0xff] %v1647
        %s1664 = sand.u32 %s131, 1
        %s1665 = scalar_lea.sflag [#allocation4], %s1664
        %s1666 = sand.u32 %s131, 1
        %s1667 = smul.addr %s1666, 64
        %s1668 = scalar_lea.vmem [#allocation7], %s1667
        %s1669 = sand.u32 %s157, 1
        %s1670 = scalar_lea.sflag [#allocation9], %s1669
        %s1671 = sand.u32 %s157, 1
        %s1672 = smul.addr %s1671, 64
        %s1673 = scalar_lea.vmem [#allocation8], %s1672
        // Predicated region
        $region45: #{tpu_custom_call.1} parent=35 // pred_check
          %p1674 = pneg %p141
        $region46: #{tpu_custom_call.1} parent=35 // pred_check_branch
          %1676 = sbr.rel (%p1674) target = $region48
        $region47: #{tpu_custom_call.1} parent=35 // pred_region
          %s1677 = smul.u32 2, %s29
          %s1679 = ssub.s32 1024, 1024
          %1680 = vsyncadd %s1665, %s1679
          %s1681 = smul.addr %s1677, 128
          %s1682 = scalar_lea.hbm %s4, %s1681
          %s1683 = sshll.u32 %s1668, 4
          %s1684 = int_to_ptr.vmem [resolvable:$true] %s1683
          %1689 = dma.vmem_to_hbm [thread:$0]  %s1684, 1024, %s1682, %s1665, 256, 512, 16
        $region48: #{tpu_custom_call.1} parent=35 // pred_fallthru
          _
        // Predicated region
        $region49: #{tpu_custom_call.1} parent=35 // pred_check
          %p1690 = pneg %p167
        $region50: #{tpu_custom_call.1} parent=35 // pred_check_branch
          %1692 = sbr.rel (%p1690) target = $region52
        $region51: #{tpu_custom_call.1} parent=35 // pred_region
          %s1693 = smul.u32 2, %s29
          %s1695 = ssub.s32 1024, 1024
          %1696 = vsyncadd %s1670, %s1695
          %s1697 = smul.addr %s1693, 128
          %s1698 = scalar_lea.hbm %s5, %s1697
          %s1699 = sshll.u32 %s1673, 4
          %s1700 = int_to_ptr.vmem [resolvable:$true] %s1699
          %1705 = dma.vmem_to_hbm [thread:$0]  %s1700, 1024, %s1698, %s1670, 256, 512, 16
        $region52: #{tpu_custom_call.1} parent=35 // pred_fallthru
          _
      $region36: #{tpu_custom_call.1} parent=5 // pred_fallthru
        _
      %p1706 = scmp.le.s32.totalorder 2, %s24
      // Predicated region
      $region53: #{tpu_custom_call.1} parent=5 // pred_check
        %p1707 = pneg %p1706
      $region54: #{tpu_custom_call.1} parent=5 // pred_check_branch
        %1709 = sbr.rel (%p1707) target = $region56
      $region55: #{tpu_custom_call.1} parent=5 // pred_region
        %s1710 = ssub.s32 %s24, 2
        // Predicated region
        $region57: #{tpu_custom_call.1} parent=55 // pred_check
          %p1711 = pneg %p147
        $region58: #{tpu_custom_call.1} parent=55 // pred_check_branch
          %1713 = sbr.rel (%p1711) target = $region60
        $region59: #{tpu_custom_call.1} parent=55 // pred_region
          %s1714 = sand.u32 %s132, 1
          %s1715 = scalar_lea.sflag [#allocation4], %s1714
          %s1716 = sand.u32 %s132, 1
          %s1717 = smul.addr %s1716, 64
          %s1718 = scalar_lea.vmem [#allocation7], %s1717
          %1719 = dma.done %s1715, 1024
        $region60: #{tpu_custom_call.1} parent=55 // pred_fallthru
          _
        // Predicated region
        $region61: #{tpu_custom_call.1} parent=55 // pred_check
          %p1720 = pneg %p173
        $region62: #{tpu_custom_call.1} parent=55 // pred_check_branch
          %1722 = sbr.rel (%p1720) target = $region64
        $region63: #{tpu_custom_call.1} parent=55 // pred_region
          %s1723 = sand.u32 %s158, 1
          %s1724 = scalar_lea.sflag [#allocation9], %s1723
          %s1725 = sand.u32 %s158, 1
          %s1726 = smul.addr %s1725, 64
          %s1727 = scalar_lea.vmem [#allocation8], %s1726
          %1728 = dma.done %s1724, 1024
        $region64: #{tpu_custom_call.1} parent=55 // pred_fallthru
          _
      $region56: #{tpu_custom_call.1} parent=5 // pred_fallthru
        _
    $region6: #{tpu_custom_call.1} parent=1 // loop_footer
      %s28 = sadd.s32 1, %s24
    $region7: #{tpu_custom_call.1} parent=1 // loop_footer_branch
      %23 = sbr.rel target = $region3
    $region8: #{tpu_custom_call.1} parent=1 // loop_exit
      _
    %1729 = vsyncpa [#allocation3], 1
    %s1730 = scalar_lea.sflag [#allocation3], 1
    %1731 = vsyncpa %s1730, 1
    %1732 = vsyncpa [#allocation6], 1
    %s1733 = scalar_lea.sflag [#allocation6], 1
    %1734 = vsyncpa %s1733, 1
    %1735 = vsyncpa [#allocation4], 1
    %s1736 = scalar_lea.sflag [#allocation4], 1
    %1737 = vsyncpa %s1736, 1
    %1738 = vsyncpa [#allocation9], 1
    %s1739 = scalar_lea.sflag [#allocation9], 1
    %1740 = vsyncpa %s1739, 1

</llo_original>
